<compile_context>
chip_gen: v6e
topology: v6e:2x2x1
jax: 0.10.0
libtpu: 0.0.40
codegen_flags: <defaults>
</compile_context>

<pallas_src>
import functools

import jax
import jax.numpy as jnp
from jax.experimental import pallas as pl
from jax.experimental.pallas import tpu as pltpu

EXPANSION = 1          # BasicBlock
BN_EPS = 1e-5
_VMEM_LIMIT = 32 * 1024 * 1024     # safe on v5e/v6e (128 MiB phys) and v7x (64 MiB phys)


# ----------------------------------------------------------------------------
# Small helpers
# ----------------------------------------------------------------------------

def _round_up(x, m):
    return ((x + m - 1) // m) * m


def _largest_divisor_leq(n, cap):
    cap = max(1, min(n, cap))
    for d in range(cap, 0, -1):
        if n % d == 0:
            return d
    return 1


def _mm_dims(M, K, N):
    """256-aligned tile choices for the tiled MXU matmul (bf16 in, f32 acc)."""
    if M >= 256:
        Mp, tm = _round_up(M, 256), 256
    else:
        Mp = _round_up(M, 8)
        tm = Mp
    Kp = _round_up(K, 128)
    if Kp <= 2560:                       # single K step for every ResNet shape
        tk = Kp
    else:
        tk = 128
        for c in (2048, 1536, 1280, 1024, 512, 256):
            if Kp % c == 0:
                tk = c
                break
    if N % 256 == 0:
        tn = 256
    elif N % 128 == 0:
        tn = 128
    else:
        tn = N                            # full width for C=64 / num_class
    return Mp, Kp, tm, tk, tn


# ----------------------------------------------------------------------------
# Pallas kernels
# ----------------------------------------------------------------------------

def _conv3x3s1_kernel(x_ref, w_ref, m_ref, o_ref, sum_ref, sq_ref, *, cin, wp):
    """Fused (no-im2col) 3x3 / stride-1 conv for one (Cout tile, image) cell.

    x_ref : (1, (Ho+3)*Wp, Cin)  zero-padded image, spatial dims flattened.
    w_ref : (9*Cin, tn)          HWIO weights flattened over (tap, Cin).
    m_ref : (1, Ho*Wp, 1)        1.0 on valid output columns, 0.0 on wrap-around.
    o_ref : (1, Ho*Wp, tn)       bf16 conv output (garbage columns zeroed).
    sum_ref / sq_ref : (1,1,tn)  per-channel sum / sum-of-squares (BN stats).
    """
    mrows = o_ref.shape[1]
    tn = o_ref.shape[2]
    acc = jnp.zeros((mrows, tn), jnp.float32)
    for di in range(3):
        for dj in range(3):
            off = di * wp + dj                              # static row offset
            a = x_ref[0, pl.ds(off, mrows), :]              # (Mrows, Cin) slab
            wt = w_ref[pl.ds((di * 3 + dj) * cin, cin), :]  # (Cin, tn)
            acc = acc + jnp.dot(a, wt, preferred_element_type=jnp.float32)
    acc = acc * m_ref[0]                                    # zero wrap-around cols
    o_ref[0] = acc.astype(o_ref.dtype)
    sum_ref[0] = jnp.sum(acc, axis=0, keepdims=True)
    sq_ref[0] = jnp.sum(acc * acc, axis=0, keepdims=True)


def _mm_stats_kernel(a_ref, b_ref, o_ref, sum_ref, sq_ref, acc_ref):
    """(M,N,K)-tiled bf16 MXU matmul, f32 accumulator, bf16 output.  The last-K
    epilogue also emits per-channel partial sums / sums-of-squares (BN stats
    fused into the matmul -> no extra HBM read pass)."""
    @pl.when(pl.program_id(2) == 0)
    def _():
        acc_ref[...] = jnp.zeros_like(acc_ref)

    acc_ref[...] += jnp.dot(a_ref[...], b_ref[...],
                            preferred_element_type=jnp.float32)

    @pl.when(pl.program_id(2) == pl.num_programs(2) - 1)
    def _():
        res = acc_ref[...]
        o_ref[...] = res.astype(o_ref.dtype)
        r3 = res.reshape(res.shape[0] // 8, 8, res.shape[1])   # sublane-aligned split
        sum_ref[...] = jnp.sum(r3, axis=0, keepdims=True)
        sq_ref[...] = jnp.sum(r3 * r3, axis=0, keepdims=True)


def _mm_bias_kernel(a_ref, b_ref, bias_ref, o_ref, acc_ref):
    """Same tiled matmul with a broadcast bias added in the epilogue (fc layer)."""
    @pl.when(pl.program_id(2) == 0)
    def _():
        acc_ref[...] = jnp.zeros_like(acc_ref)

    acc_ref[...] += jnp.dot(a_ref[...], b_ref[...],
                            preferred_element_type=jnp.float32)

    @pl.when(pl.program_id(2) == pl.num_programs(2) - 1)
    def _():
        o_ref[...] = acc_ref[...] + bias_ref[...]


def _bn4_relu_kernel(x_ref, s_ref, t_ref, o_ref):
    wo = o_ref.shape[2]
    x = x_ref[:, :, :wo, :].astype(jnp.float32)      # drops garbage cols (if any)
    o_ref[...] = jnp.maximum(x * s_ref[...] + t_ref[...], 0.0).astype(o_ref.dtype)


def _bn4_kernel(x_ref, s_ref, t_ref, o_ref):
    wo = o_ref.shape[2]
    x = x_ref[:, :, :wo, :].astype(jnp.float32)
    o_ref[...] = (x * s_ref[...] + t_ref[...]).astype(o_ref.dtype)


def _bn4_res_relu_kernel(x_ref, s_ref, t_ref, r_ref, o_ref):
    wo = o_ref.shape[2]
    x = x_ref[:, :, :wo, :].astype(jnp.float32)
    y = x * s_ref[...] + t_ref[...] + r_ref[...].astype(jnp.float32)
    o_ref[...] = jnp.maximum(y, 0.0).astype(o_ref.dtype)


def _maxpool_kernel(x_ref, o_ref):
    """3x3 / stride-2 max pool, separable form: 3 sublane-strided W reads
    (down from 9 H+W strided reads), then a contiguous-slice H reduction."""
    _, Ho, Wo, C = o_ref.shape
    c0 = x_ref[:, :, pl.ds(0, Wo, 2), :]
    c1 = x_ref[:, :, pl.ds(1, Wo, 2), :]
    c2 = x_ref[:, :, pl.ds(2, Wo, 2), :]
    mw = jnp.maximum(jnp.maximum(c0, c1), c2)                # (1, Hp, Wo, C)
    a = mw[:, 0:2 * Ho, :, :].reshape(1, Ho, 2, Wo, C)       # rows 0..2Ho-1
    b = mw[:, 2:2 * Ho + 2, :, :].reshape(1, Ho, 2, Wo, C)   # rows 2..2Ho+1
    o_ref[...] = jnp.maximum(jnp.maximum(a[:, :, 0], a[:, :, 1]), b[:, :, 0])


def _avgpool_kernel(x_ref, o_ref):
    """x: (1, H*W, C) -> o: (1, 1, C) global average (AdaptiveAvgPool2d((1,1)))."""
    o_ref[...] = jnp.mean(x_ref[...].astype(jnp.float32), axis=1, keepdims=True)


# ----------------------------------------------------------------------------
# Matmul wrappers
# ----------------------------------------------------------------------------

def _prep_mm(a, b, Mp, Kp):
    M, K = a.shape
    a = a.astype(jnp.bfloat16)
    b = b.astype(jnp.bfloat16)
    if (Mp, Kp) != (M, K):
        a = jnp.pad(a, ((0, Mp - M), (0, Kp - K)))
    if Kp != K:
        b = jnp.pad(b, ((0, Kp - K), (0, 0)))
    return a, b


def matmul_with_bn_stats(a, b):
    """a: (M,K) @ b: (K,N) -> (out (Mp,N) bf16, chan_sum (gm,8,N), chan_sumsq)."""
    M, K = a.shape
    _, N = b.shape
    Mp, Kp, tm, tk, tn = _mm_dims(M, K, N)
    a, b = _prep_mm(a, b, Mp, Kp)
    gm, gn, gk = Mp // tm, N // tn, Kp // tk
    out, ssum, ssq = pl.pallas_call(
        _mm_stats_kernel,
        out_shape=(jax.ShapeDtypeStruct((Mp, N), jnp.bfloat16),
                   jax.ShapeDtypeStruct((gm, 8, N), jnp.float32),
                   jax.ShapeDtypeStruct((gm, 8, N), jnp.float32)),
        grid=(gm, gn, gk),
        in_specs=[pl.BlockSpec((tm, tk), lambda i, j, k: (i, k)),
                  pl.BlockSpec((tk, tn), lambda i, j, k: (k, j))],
        out_specs=[pl.BlockSpec((tm, tn), lambda i, j, k: (i, j)),
                   pl.BlockSpec((1, 8, tn), lambda i, j, k: (i, 0, j)),
                   pl.BlockSpec((1, 8, tn), lambda i, j, k: (i, 0, j))],
        scratch_shapes=[pltpu.VMEM((tm, tn), jnp.float32)],
        compiler_params=pltpu.CompilerParams(
            dimension_semantics=("parallel", "parallel", "arbitrary"),
            vmem_limit_bytes=_VMEM_LIMIT),
    )(a, b)
    return out, ssum, ssq


def matmul_bias(a, b, bias):
    """a: (M,K) @ b: (K,N) + bias (N,) -> (M,N) f32 (fc layer)."""
    M, K = a.shape
    _, N = b.shape
    Mp, Kp, tm, tk, tn = _mm_dims(M, K, N)
    a, b = _prep_mm(a, b, Mp, Kp)
    gm, gn, gk = Mp // tm, N // tn, Kp // tk
    out = pl.pallas_call(
        _mm_bias_kernel,
        out_shape=jax.ShapeDtypeStruct((Mp, N), jnp.float32),
        grid=(gm, gn, gk),
        in_specs=[pl.BlockSpec((tm, tk), lambda i, j, k: (i, k)),
                  pl.BlockSpec((tk, tn), lambda i, j, k: (k, j)),
                  pl.BlockSpec((1, tn), lambda i, j, k: (0, j))],
        out_specs=pl.BlockSpec((tm, tn), lambda i, j, k: (i, j)),
        scratch_shapes=[pltpu.VMEM((tm, tn), jnp.float32)],
        compiler_params=pltpu.CompilerParams(
            dimension_semantics=("parallel", "parallel", "arbitrary"),
            vmem_limit_bytes=_VMEM_LIMIT),
    )(a, b, bias.reshape(1, N).astype(jnp.float32))
    return out[:M]


# ----------------------------------------------------------------------------
# Fused 3x3 / stride-1 conv (no im2col materialization)
# ----------------------------------------------------------------------------

def _fused_conv_fits_vmem(H, W, cin, cout):
    wp = W + 2
    tn = 256 if cout % 256 == 0 else cout
    mrows = H * wp
    need = (2 * (H + 3) * wp * cin * 2      # x block, double-buffered, bf16
            + 2 * 9 * cin * tn * 2          # weight block, bf16
            + 2 * mrows * tn * 2            # output block, bf16
            + mrows * tn * 4                # f32 accumulator value
            + mrows * cin * 2)              # one live tap slab
    return need < 12 * 1024 * 1024


def conv3x3_s1_fused(x, w):
    """x: (N,H,W,Cin) NHWC bf16, w: (3,3,Cin,Cout) HWIO.
    Returns (conv_out (N, H*(W+2), Cout) bf16 [garbage cols zeroed], sum, sumsq)."""
    N, H, W, Cin = x.shape
    Cout = w.shape[3]
    Ho, Wo = H, W
    Wp = W + 2
    mrows = Ho * Wp
    rows_in = (Ho + 3) * Wp     # one extra zero row keeps the last tap slab in-bounds
    xp = jnp.pad(x.astype(jnp.bfloat16),
                 ((0, 0), (1, 2), (1, 1), (0, 0))).reshape(N, rows_in, Cin)
    wmat = w.reshape(9 * Cin, Cout).astype(jnp.bfloat16)
    mask = jnp.tile((jnp.arange(Wp) < Wo).astype(jnp.float32), Ho).reshape(1, mrows, 1)
    tn = 256 if Cout % 256 == 0 else Cout
    gj = Cout // tn
    kernel = functools.partial(_conv3x3s1_kernel, cin=Cin, wp=Wp)
    conv_out, ssum, ssq = pl.pallas_call(
        kernel,
        out_shape=(jax.ShapeDtypeStruct((N, mrows, Cout), jnp.bfloat16),
                   jax.ShapeDtypeStruct((N, 1, Cout), jnp.float32),
                   jax.ShapeDtypeStruct((N, 1, Cout), jnp.float32)),
        grid=(gj, N),           # Cout tile outer -> weight block stays resident across images
        in_specs=[pl.BlockSpec((1, rows_in, Cin), lambda j, n: (n, 0, 0)),
                  pl.BlockSpec((9 * Cin, tn), lambda j, n: (0, j)),
                  pl.BlockSpec((1, mrows, 1), lambda j, n: (0, 0, 0))],
        out_specs=[pl.BlockSpec((1, mrows, tn), lambda j, n: (n, 0, j)),
                   pl.BlockSpec((1, 1, tn), lambda j, n: (n, 0, j)),
                   pl.BlockSpec((1, 1, tn), lambda j, n: (n, 0, j))],
        compiler_params=pltpu.CompilerParams(
            dimension_semantics=("parallel", "parallel"),
            vmem_limit_bytes=_VMEM_LIMIT),
    )(xp, wmat, mask)
    return conv_out, ssum, ssq


# ----------------------------------------------------------------------------
# Elementwise / pooling wrappers
# ----------------------------------------------------------------------------

def bn_act_nhwc(x4, scale, shift, wo, residual=None, relu=True):
    """Per-channel affine (+ optional residual, + optional ReLU) on an NHWC slab.

    x4 is (N, Ho, Wi, C) with Wi >= wo; only the first `wo` columns are kept,
    which also drops the wrap-around columns of the fused conv output without a
    separate slice pass.  Output is bf16 (halves HBM traffic vs f32)."""
    # TODO(synk): v5e-only lane-fold (M,64)->(M/2,128) for lane-dense stores on
    #             C=64 layers is not implemented.
    N, Ho, Wi, C = x4.shape
    s = scale.reshape(1, C).astype(jnp.float32)
    t = shift.reshape(1, C).astype(jnp.float32)
    target_rows = max(1, (1 << 20) // max(1, Wi * C * 2))
    th = Ho if Ho <= target_rows else _largest_divisor_leq(Ho, target_rows)
    grid = (N, Ho // th)
    x_spec = pl.BlockSpec((1, th, Wi, C), lambda n, h: (n, h, 0, 0))
    o_spec = pl.BlockSpec((1, th, wo, C), lambda n, h: (n, h, 0, 0))
    sc_spec = pl.BlockSpec((1, C), lambda n, h: (0, 0))
    cp = pltpu.CompilerParams(dimension_semantics=("parallel", "parallel"))
    out_shape = jax.ShapeDtypeStruct((N, Ho, wo, C), jnp.bfloat16)
    if residual is not None:
        r_spec = pl.BlockSpec((1, th, wo, C), lambda n, h: (n, h, 0, 0))
        return pl.pallas_call(
            _bn4_res_relu_kernel, out_shape=out_shape, grid=grid,
            in_specs=[x_spec, sc_spec, sc_spec, r_spec],
            out_specs=o_spec, compiler_params=cp)(x4, s, t, residual)
    kern = _bn4_relu_kernel if relu else _bn4_kernel
    return pl.pallas_call(
        kern, out_shape=out_shape, grid=grid,
        in_specs=[x_spec, sc_spec, sc_spec],
        out_specs=o_spec, compiler_params=cp)(x4, s, t)


def maxpool_3x3_s2_p1(x):
    """MaxPool2d(kernel_size=3, stride=2, padding=1) on NHWC input, per-image grid."""
    # TODO(synk): H-axis tiling (overlapping windows) not implemented; per-image
    #             blocks are small enough for the stem output on all generations.
    N, H, W, C = x.shape
    Ho = (H - 1) // 2 + 1
    Wo = (W - 1) // 2 + 1
    Hp = 2 * Ho + 2
    Wp = max(W + 2, 2 * Wo + 1)
    xp = jnp.pad(x, ((0, 0), (1, Hp - H - 1), (1, Wp - W - 1), (0, 0)),
                 constant_values=-jnp.inf)
    return pl.pallas_call(
        _maxpool_kernel,
        out_shape=jax.ShapeDtypeStruct((N, Ho, Wo, C), x.dtype),
        grid=(N,),
        in_specs=[pl.BlockSpec((1, Hp, Wp, C), lambda b: (b, 0, 0, 0))],
        out_specs=pl.BlockSpec((1, Ho, Wo, C), lambda b: (b, 0, 0, 0)),
        compiler_params=pltpu.CompilerParams(dimension_semantics=("parallel",)),
    )(xp)


def adaptive_avgpool_1x1(x):
    """Global average pool, gridded over the batch (VMEM-safe on v7x)."""
    N, H, W, C = x.shape
    x3 = x.reshape(N, H * W, C)
    out = pl.pallas_call(
        _avgpool_kernel,
        out_shape=jax.ShapeDtypeStruct((N, 1, C), jnp.float32),
        grid=(N,),
        in_specs=[pl.BlockSpec((1, H * W, C), lambda b: (b, 0, 0))],
        out_specs=pl.BlockSpec((1, 1, C), lambda b: (b, 0, 0)),
        compiler_params=pltpu.CompilerParams(dimension_semantics=("parallel",)),
    )(x3)
    return out.reshape(N, C)


# ----------------------------------------------------------------------------
# Conv + BatchNorm (+residual) (+ReLU) block
# ----------------------------------------------------------------------------

def conv_bn(x, w, bn_p, stride, padding, residual=None, relu=True):
    """x: (N,H,W,Cin) NHWC bf16, w: (KH,KW,Cin,Cout) HWIO."""
    N, H, W, Cin = x.shape
    KH, KW, _, Cout = w.shape
    Ho = (H + 2 * padding - KH) // stride + 1
    Wo = (W + 2 * padding - KW) // stride + 1
    M = N * Ho * Wo

    if (stride == 1 and KH == 3 and KW == 3 and padding == 1
            and _fused_conv_fits_vmem(H, W, Cin, Cout)):
        # Fused shifted-slab path: no im2col buffer in HBM at all.
        conv_out, ssum, ssq = conv3x3_s1_fused(x, w)
        x4 = conv_out.reshape(N, Ho, Wo + 2, Cout)           # free reshape
        total = jnp.sum(ssum, axis=(0, 1))
        total_sq = jnp.sum(ssq, axis=(0, 1))
    else:
        # Stride-2 convs (stem 7x7, 3x3 downsampling) / 1x1 downsample convs.
        if KH == 1 and KW == 1:
            a = x[:, ::stride, ::stride, :].astype(jnp.bfloat16).reshape(M, Cin)
        else:
            xp = jnp.pad(x.astype(jnp.bfloat16),
                         ((0, 0), (padding, padding), (padding, padding), (0, 0)))
            cols = []
            for di in range(KH):
                for dj in range(KW):
                    cols.append(jax.lax.slice(
                        xp, (0, di, dj, 0),
                        (N, di + (Ho - 1) * stride + 1,
                         dj + (Wo - 1) * stride + 1, Cin),
                        (1, stride, stride, 1)))
            a = jnp.concatenate(cols, axis=-1).reshape(M, KH * KW * Cin)
        bmat = w.reshape(KH * KW * Cin, Cout).astype(jnp.bfloat16)
        out_p, sums, sqs = matmul_with_bn_stats(a, bmat)      # (Mp, Cout) bf16
        x4 = out_p[:M].reshape(N, Ho, Wo, Cout)
        total = jnp.sum(sums, axis=(0, 1))
        total_sq = jnp.sum(sqs, axis=(0, 1))

    # Training-mode BatchNorm statistics (padded / masked rows contribute zero).
    mean = total / M
    var = jnp.maximum(total_sq / M - mean * mean, 0.0)
    scale = bn_p["gamma"] * jax.lax.rsqrt(var + BN_EPS)
    shift = bn_p["beta"] - mean * scale

    return bn_act_nhwc(x4, scale, shift, Wo, residual=residual, relu=relu)


# ----------------------------------------------------------------------------
# Parameter init (deterministic, in-script) and forward pass
# ----------------------------------------------------------------------------

def init_conv(key, kh, kw, cin, cout):
    fan_in = kh * kw * cin
    return jax.random.normal(key, (kh, kw, cin, cout), jnp.float32) / jnp.sqrt(float(fan_in))


def init_bn(key, c):
    k1, k2 = jax.random.split(key)
    return {"gamma": 1.0 + 0.1 * jax.random.normal(k1, (c,), jnp.float32),
            "beta": 0.1 * jax.random.normal(k2, (c,), jnp.float32)}


def init_basic_block(key, inplane, plane, stride):
    keys = jax.random.split(key, 6)
    p = {"stride": stride,
         "conv1": init_conv(keys[0], 3, 3, inplane, plane),
         "bn1": init_bn(keys[1], plane),
         "conv2": init_conv(keys[2], 3, 3, plane, plane),
         "bn2": init_bn(keys[3], plane)}
    if stride != 1 or inplane != plane * EXPANSION:
        p["ds_conv"] = init_conv(keys[4], 1, 1, inplane, plane * EXPANSION)
        p["ds_bn"] = init_bn(keys[5], plane * EXPANSION)
    return p


def init_resnet(key, layers_list, num_class):
    keys = iter(jax.random.split(key, 64))
    params = {"conv1": init_conv(next(keys), 7, 7, 3, 64),
              "bn1": init_bn(next(keys), 64)}
    inplane = 64
    layers = []
    for plane, num, stride in zip((64, 128, 256, 512), layers_list, (1, 2, 2, 2)):
        blocks = [init_basic_block(next(keys), inplane, plane, stride)]
        inplane = plane * EXPANSION
        for _ in range(1, num):
            blocks.append(init_basic_block(next(keys), inplane, plane, 1))
        layers.append(blocks)
    params["layers"] = layers
    kfc1, kfc2 = jax.random.split(next(keys))
    params["fc_w"] = 0.05 * jax.random.normal(kfc1, (512 * EXPANSION, num_class), jnp.float32)
    params["fc_b"] = 0.01 * jax.random.normal(kfc2, (num_class,), jnp.float32)
    return params


def basic_block_forward(x, p):
    identity = x
    out = conv_bn(x, p["conv1"], p["bn1"], stride=p["stride"], padding=1, relu=True)
    if "ds_conv" in p:
        identity = conv_bn(x, p["ds_conv"], p["ds_bn"], stride=p["stride"],
                           padding=0, relu=False)
    out = conv_bn(out, p["conv2"], p["bn2"], stride=1, padding=1,
                  residual=identity, relu=True)
    return out


def resnet_forward(params, x_nchw):
    x = jnp.transpose(x_nchw, (0, 2, 3, 1)).astype(jnp.bfloat16)     # NCHW -> NHWC
    x = conv_bn(x, params["conv1"], params["bn1"], stride=2, padding=3, relu=True)
    x = maxpool_3x3_s2_p1(x)
    for blocks in params["layers"]:
        for blk in blocks:
            x = basic_block_forward(x, blk)
    pooled = adaptive_avgpool_1x1(x)                                  # (N, 512) f32
    return matmul_bias(pooled, params["fc_w"], params["fc_b"])        # (N, num_class)


if __name__ == "__main__":
    key = jax.random.PRNGKey(0)
    kparams, kx = jax.random.split(key)
    layers_list = [1, 1, 1, 1]     # small synthetic BasicBlock ResNet
    num_class = 10
    params = init_resnet(kparams, layers_list, num_class)
    x = jax.random.normal(kx, (2, 3, 32, 32), jnp.float32)            # NCHW like PyTorch
    out = jax.block_until_ready(resnet_forward(params, x))
    assert out.shape == (2, num_class) and out.dtype == jnp.float32
    print("KERNEL_OK")
</pallas_src>

<mosaic_0001>
module attributes {stable_mosaic.version = 11 : i64} {
  func.func @_mm_stats_kernel(%arg0: i32, %arg1: i32, %arg2: i32, %arg3: memref<256x256xbf16, #tpu.memory_space<vmem>>, %arg4: memref<256x64xbf16, #tpu.memory_space<vmem>>, %arg5: memref<256x64xbf16, #tpu.memory_space<vmem>>, %arg6: memref<1x8x64xf32, #tpu.memory_space<vmem>>, %arg7: memref<1x8x64xf32, #tpu.memory_space<vmem>>, %arg8: memref<256x64xf32, #tpu.memory_space<vmem>>) attributes {dimension_semantics = [#tpu.dimension_semantics<parallel>, #tpu.dimension_semantics<parallel>, #tpu.dimension_semantics<arbitrary>], iteration_bounds = array<i64: 2, 1, 1>, scalar_prefetch = 0 : i64, scratch_operands = 1 : i64, tpu.core_type = #tpu.core_type<tc>, window_params = [{transform_indices = @transform_0, window_bounds = array<i64: 256, 256>}, {transform_indices = @transform_1, window_bounds = array<i64: 256, 64>}, {transform_indices = @transform_2, window_bounds = array<i64: 256, 64>}, {transform_indices = @transform_3, window_bounds = array<i64: 1, 8, 64>}, {transform_indices = @transform_4, window_bounds = array<i64: 1, 8, 64>}]} {
    %c0_i32 = arith.constant 0 : i32
    %0 = arith.cmpi eq, %arg2, %c0_i32 : i32
    %1 = arith.extui %0 : i1 to i32
    %c0_i32_0 = arith.constant 0 : i32
    %2 = arith.cmpi ne, %1, %c0_i32_0 : i32
    scf.if %2 {
      %cst_10 = arith.constant 0.000000e+00 : f32
      %12 = vector.broadcast %cst_10 : f32 to vector<256x64xf32>
      %c0_11 = arith.constant 0 : index
      %c0_12 = arith.constant 0 : index
      %13 = vector.load %arg8[%c0_11, %c0_12] : memref<256x64xf32, #tpu.memory_space<vmem>>, vector<256x64xf32>
      tpu.vector_store %arg8[%c0_11, %c0_12], %12 {strides = array<i32>} : memref<256x64xf32, #tpu.memory_space<vmem>>, vector<256x64xf32>,
    } else {
    }
    %c0 = arith.constant 0 : index
    %c0_1 = arith.constant 0 : index
    %3 = vector.load %arg8[%c0, %c0_1] : memref<256x64xf32, #tpu.memory_space<vmem>>, vector<256x64xf32>
    %c0_2 = arith.constant 0 : index
    %c0_3 = arith.constant 0 : index
    %4 = vector.load %arg3[%c0_2, %c0_3] : memref<256x256xbf16, #tpu.memory_space<vmem>>, vector<256x256xbf16>
    %c0_4 = arith.constant 0 : index
    %c0_5 = arith.constant 0 : index
    %5 = vector.load %arg4[%c0_4, %c0_5] : memref<256x64xbf16, #tpu.memory_space<vmem>>, vector<256x64xbf16>
    %cst = arith.constant dense<0.000000e+00> : vector<256x64xf32>
    %6 = tpu.matmul %4, %5, %cst {dimension_numbers = #tpu.dot_dimension_numbers<[1], [0], [0], [1], [0, 0, 1, 1], [], []>} : vector<256x256xbf16>, vector<256x64xbf16>, vector<256x64xf32> -> vector<256x64xf32>
    %7 = arith.addf %3, %6 : vector<256x64xf32>
    %c0_6 = arith.constant 0 : index
    %c0_7 = arith.constant 0 : index
    %8 = vector.load %arg8[%c0_6, %c0_7] : memref<256x64xf32, #tpu.memory_space<vmem>>, vector<256x64xf32>
    tpu.vector_store %arg8[%c0_6, %c0_7], %7 {strides = array<i32>} : memref<256x64xf32, #tpu.memory_space<vmem>>, vector<256x64xf32>,
    %c0_i32_8 = arith.constant 0 : i32
    %9 = arith.cmpi eq, %arg2, %c0_i32_8 : i32
    %10 = arith.extui %9 : i1 to i32
    %c0_i32_9 = arith.constant 0 : i32
    %11 = arith.cmpi ne, %10, %c0_i32_9 : i32
    scf.if %11 {
      %c0_10 = arith.constant 0 : index
      %c0_11 = arith.constant 0 : index
      %12 = vector.load %arg8[%c0_10, %c0_11] : memref<256x64xf32, #tpu.memory_space<vmem>>, vector<256x64xf32>
      %13 = arith.truncf %12 : vector<256x64xf32> to vector<256x64xbf16>
      %c0_12 = arith.constant 0 : index
      %c0_13 = arith.constant 0 : index
      %14 = vector.load %arg5[%c0_12, %c0_13] : memref<256x64xbf16, #tpu.memory_space<vmem>>, vector<256x64xbf16>
      tpu.vector_store %arg5[%c0_12, %c0_13], %13 {strides = array<i32>} : memref<256x64xbf16, #tpu.memory_space<vmem>>, vector<256x64xbf16>,
      %15 = vector.shape_cast %12 : vector<256x64xf32> to vector<32x8x64xf32>
      %cst_14 = arith.constant dense<0.000000e+00> : vector<8x64xf32>
      %16 = vector.multi_reduction <add>, %15, %cst_14 [0] : vector<32x8x64xf32> to vector<8x64xf32>
      %17 = vector.shape_cast %16 : vector<8x64xf32> to vector<1x8x64xf32>
      %c0_15 = arith.constant 0 : index
      %c0_16 = arith.constant 0 : index
      %c0_17 = arith.constant 0 : index
      %18 = vector.load %arg6[%c0_15, %c0_16, %c0_17] : memref<1x8x64xf32, #tpu.memory_space<vmem>>, vector<1x8x64xf32>
      tpu.vector_store %arg6[%c0_15, %c0_16, %c0_17], %17 {strides = array<i32>} : memref<1x8x64xf32, #tpu.memory_space<vmem>>, vector<1x8x64xf32>,
      %19 = arith.mulf %15, %15 : vector<32x8x64xf32>
      %cst_18 = arith.constant dense<0.000000e+00> : vector<8x64xf32>
      %20 = vector.multi_reduction <add>, %19, %cst_18 [0] : vector<32x8x64xf32> to vector<8x64xf32>
      %21 = vector.shape_cast %20 : vector<8x64xf32> to vector<1x8x64xf32>
      %c0_19 = arith.constant 0 : index
      %c0_20 = arith.constant 0 : index
      %c0_21 = arith.constant 0 : index
      %22 = vector.load %arg7[%c0_19, %c0_20, %c0_21] : memref<1x8x64xf32, #tpu.memory_space<vmem>>, vector<1x8x64xf32>
      tpu.vector_store %arg7[%c0_19, %c0_20, %c0_21], %21 {strides = array<i32>} : memref<1x8x64xf32, #tpu.memory_space<vmem>>, vector<1x8x64xf32>,
    } else {
    }
    return
  }
  func.func @transform_0(%arg0: i32, %arg1: i32, %arg2: i32) -> (i32, i32) {
    %c0_i32 = arith.constant 0 : i32
    return %arg0, %arg2 : i32, i32
  }
  func.func @transform_1(%arg0: i32, %arg1: i32, %arg2: i32) -> (i32, i32) {
    %c0_i32 = arith.constant 0 : i32
    return %arg2, %arg1 : i32, i32
  }
  func.func @transform_2(%arg0: i32, %arg1: i32, %arg2: i32) -> (i32, i32) {
    %c0_i32 = arith.constant 0 : i32
    return %arg0, %arg1 : i32, i32
  }
  func.func @transform_3(%arg0: i32, %arg1: i32, %arg2: i32) -> (i32, i32, i32) {
    %c0_i32 = arith.constant 0 : i32
    %c0_i32_0 = arith.constant 0 : i32
    return %arg0, %c0_i32, %arg1 : i32, i32, i32
  }
  func.func @transform_4(%arg0: i32, %arg1: i32, %arg2: i32) -> (i32, i32, i32) {
    %c0_i32 = arith.constant 0 : i32
    %c0_i32_0 = arith.constant 0 : i32
    return %arg0, %c0_i32, %arg1 : i32, i32, i32
  }
}

</mosaic_0001>

<llo_original>
// kernel: tpu_custom_call.1
$region0: #{tpu_custom_call.1}
  #allocation0 [shape = 'u32[]', space=smem, size = 0x4, offset = 0x4, fixed_abs, tag = 'smem constant byte address 0x4 - core index']
  #allocation1 [shape = 'u32[144,128]{1,0:T(1,128)}', space=vmem, size = 0x12000, scoped, tag = 'internal scratch']
  #allocation2 [shape = 'f32[256,64]{1,0:T(8,128)}', space=vmem, size = 0x20000, scoped, tag = 'scratch operand']
  %s0 = inlined_call_operand.hbm [shape: bf16[512,256], index: 0, kind: input, shape index: {}]
  %s1 = inlined_call_operand.vmem [shape: bf16[256,64], index: 1, kind: input, shape index: {}]
  %s2 = inlined_call_operand.vmem [shape: bf16[512,64], index: 2, kind: output, shape index: {0}]
  %s3 = inlined_call_operand.hbm [shape: f32[2,8,64], index: 3, kind: output, shape index: {1}]
  %s4 = inlined_call_operand.hbm [shape: f32[2,8,64], index: 4, kind: output, shape index: {2}]
  %5 = xla_tuple %s2, %s3, %s4
  %s6 = sld [smem:[#allocation0]]
  $region69: #{tpu_custom_call.1} parent=0
    _
  %s8 = ssub.s32 1, %s6
  %s9 = scalar_select 0, %s8, %s6
  $region1: #{tpu_custom_call.1} parent=0
    #allocation3 [shape = 'u8[262144]{0}', space=vmem, size = 0x40000, scoped, tag = 'input window, operand 0']
    #allocation4 [shape = 's32[2]{0}', space=sflag, size = 0x8, scoped, tag = 'scoped memory for tpu_custom_call.1']
    #allocation5 [shape = 's32[2]{0}', space=sflag, size = 0x8, scoped, tag = 'scoped memory for tpu_custom_call.1']
    #allocation6 [shape = 'u8[8192]{0}', space=vmem, size = 0x2000, scoped, tag = 'output window, operand 1']
    #allocation7 [shape = 'u8[8192]{0}', space=vmem, size = 0x2000, scoped, tag = 'output window, operand 2']
    #allocation8 [shape = 's32[2]{0}', space=sflag, size = 0x8, scoped, tag = 'scoped memory for tpu_custom_call.1']
    %10 = vsyncpa [#allocation4], 0
    %s11 = scalar_lea.sflag [#allocation4], 1
    %12 = vsyncpa %s11, 0
    %13 = vsyncpa [#allocation5], 0
    %s14 = scalar_lea.sflag [#allocation5], 1
    %15 = vsyncpa %s14, 0
    %16 = vsyncpa [#allocation8], 0
    %s17 = scalar_lea.sflag [#allocation8], 1
    %18 = vsyncpa %s17, 0
    loop: start=0, step=1, limit=4
    $region2: #{tpu_custom_call.1} parent=1 // loop_pre_header
      _
    $region3: #{tpu_custom_call.1} parent=1 // loop_header
      %s20 = sphi 0, %s24
      %p21 = scmp.ge.s32.totalorder %s20, 4
      %s27 = sphi 0, %s46
      %s28 = sphi 0, %s42
      %s29 = sphi 0, %s38
      %s30 = sphi 0, %s27
      %s31 = sphi 0, %s28
      %s32 = sphi 0, %s29
      %s33 = sphi 0, %s30
      %s34 = sphi 0, %s31
      %s35 = sphi 0, %s32
      %s51 = sphi 0, %s53
      %s54 = sphi 0, %s51
      %s55 = sphi 0, %s54
      %s71 = sphi 0, %s55
      %s79 = sphi 0, %s81
      %s82 = sphi 0, %s79
      %s83 = sphi 0, %s82
      %s99 = sphi 0, %s83
      %s107 = sphi 0, %s109
      %s110 = sphi 0, %s107
      %s111 = sphi 0, %s110
      %s127 = sphi 0, %s111
      %s135 = sphi 0, %s137
      %s138 = sphi 0, %s135
      %s139 = sphi 0, %s138
      %s155 = sphi 0, %s139
      %s163 = sphi 0, %s165
      %s166 = sphi 0, %s163
      %s167 = sphi 0, %s166
      %s183 = sphi 0, %s167
    $region4: #{tpu_custom_call.1} parent=1 // loop_header_branch
      %23 = sbr.rel (%p21) target = $region8
    $region5: #{tpu_custom_call.1} parent=1 // loop_body
      %s25 = ssub.s32 %s20, 1
      %s26 = ssub.s32 %s20, 2
      %s36 = sadd.s32 1, %s29
      %p37 = scmp.ge.s32.totalorder %s36, 1
      %s38 = scalar_select %p37, 0, %s36
      %s39 = sadd.s32 1, %s28
      %s40 = scalar_select %p37, %s39, %s28
      %p41 = scmp.ge.s32.totalorder %s40, 1
      %s42 = scalar_select %p41, 0, %s40
      %s43 = sadd.s32 1, %s27
      %s44 = scalar_select %p41, %s43, %s27
      %p45 = scmp.ge.s32.totalorder %s44, 2
      %s46 = scalar_select %p45, 0, %s44
      %s47 = ssub.s32 %s27, %s46
      %s48 = ssub.s32 %s29, %s38
      %s49 = sor.u32 %s47, %s48
      %p50 = scmp.eq.s32.totalorder %s49, 0
      %s52 = sadd.s32 %s51, 1
      %s53 = scalar_select %p50, %s51, %s52
      %p56 = pneg %p50
      %p57 = scmp.eq.s32.totalorder %s20, 1
      %p58 = por %p56, %p57
      %p59 = scmp.ne.s32.totalorder %s51, %s54
      %p60 = scmp.eq.s32.totalorder %s20, 0
      %p61 = por %p59, %p60
      %p62 = scmp.ne.s32.totalorder %s51, %s54
      %p63 = scmp.eq.s32.totalorder %s25, 1
      %p64 = por %p62, %p63
      %p65 = scmp.ne.s32.totalorder %s54, %s55
      %p66 = scmp.eq.s32.totalorder %s25, 0
      %p67 = por %p65, %p66
      %p68 = scmp.ne.s32.totalorder %s54, %s55
      %p69 = scmp.eq.s32.totalorder %s26, 1
      %p70 = por %p68, %p69
      %p72 = scmp.ne.s32.totalorder %s55, %s71
      %p73 = scmp.eq.s32.totalorder %s26, 0
      %p74 = por %p72, %p73
      %s75 = ssub.s32 %s29, %s38
      %s76 = ssub.s32 %s28, %s42
      %s77 = sor.u32 %s75, %s76
      %p78 = scmp.eq.s32.totalorder %s77, 0
      %s80 = sadd.s32 %s79, 1
      %s81 = scalar_select %p78, %s79, %s80
      %p84 = pneg %p78
      %p85 = scmp.eq.s32.totalorder %s20, 1
      %p86 = por %p84, %p85
      %p87 = scmp.ne.s32.totalorder %s79, %s82
      %p88 = scmp.eq.s32.totalorder %s20, 0
      %p89 = por %p87, %p88
      %p90 = scmp.ne.s32.totalorder %s79, %s82
      %p91 = scmp.eq.s32.totalorder %s25, 1
      %p92 = por %p90, %p91
      %p93 = scmp.ne.s32.totalorder %s82, %s83
      %p94 = scmp.eq.s32.totalorder %s25, 0
      %p95 = por %p93, %p94
      %p96 = scmp.ne.s32.totalorder %s82, %s83
      %p97 = scmp.eq.s32.totalorder %s26, 1
      %p98 = por %p96, %p97
      %p100 = scmp.ne.s32.totalorder %s83, %s99
      %p101 = scmp.eq.s32.totalorder %s26, 0
      %p102 = por %p100, %p101
      %s103 = ssub.s32 %s27, %s46
      %s104 = ssub.s32 %s28, %s42
      %s105 = sor.u32 %s103, %s104
      %p106 = scmp.eq.s32.totalorder %s105, 0
      %s108 = sadd.s32 %s107, 1
      %s109 = scalar_select %p106, %s107, %s108
      %p112 = pneg %p106
      %p113 = scmp.eq.s32.totalorder %s20, 1
      %p114 = por %p112, %p113
      %p115 = scmp.ne.s32.totalorder %s107, %s110
      %p116 = scmp.eq.s32.totalorder %s20, 0
      %p117 = por %p115, %p116
      %p118 = scmp.ne.s32.totalorder %s107, %s110
      %p119 = scmp.eq.s32.totalorder %s25, 1
      %p120 = por %p118, %p119
      %p121 = scmp.ne.s32.totalorder %s110, %s111
      %p122 = scmp.eq.s32.totalorder %s25, 0
      %p123 = por %p121, %p122
      %p124 = scmp.ne.s32.totalorder %s110, %s111
      %p125 = scmp.eq.s32.totalorder %s26, 1
      %p126 = por %p124, %p125
      %p128 = scmp.ne.s32.totalorder %s111, %s127
      %p129 = scmp.eq.s32.totalorder %s26, 0
      %p130 = por %p128, %p129
      %s131 = ssub.s32 %s27, %s46
      %s132 = ssub.s32 %s28, %s42
      %s133 = sor.u32 %s131, %s132
      %p134 = scmp.eq.s32.totalorder %s133, 0
      %s136 = sadd.s32 %s135, 1
      %s137 = scalar_select %p134, %s135, %s136
      %p140 = pneg %p134
      %p141 = scmp.eq.s32.totalorder %s20, 1
      %p142 = por %p140, %p141
      %p143 = scmp.ne.s32.totalorder %s135, %s138
      %p144 = scmp.eq.s32.totalorder %s20, 0
      %p145 = por %p143, %p144
      %p146 = scmp.ne.s32.totalorder %s135, %s138
      %p147 = scmp.eq.s32.totalorder %s25, 1
      %p148 = por %p146, %p147
      %p149 = scmp.ne.s32.totalorder %s138, %s139
      %p150 = scmp.eq.s32.totalorder %s25, 0
      %p151 = por %p149, %p150
      %p152 = scmp.ne.s32.totalorder %s138, %s139
      %p153 = scmp.eq.s32.totalorder %s26, 1
      %p154 = por %p152, %p153
      %p156 = scmp.ne.s32.totalorder %s139, %s155
      %p157 = scmp.eq.s32.totalorder %s26, 0
      %p158 = por %p156, %p157
      %s159 = ssub.s32 %s27, %s46
      %s160 = ssub.s32 %s28, %s42
      %s161 = sor.u32 %s159, %s160
      %p162 = scmp.eq.s32.totalorder %s161, 0
      %s164 = sadd.s32 %s163, 1
      %s165 = scalar_select %p162, %s163, %s164
      %p168 = pneg %p162
      %p169 = scmp.eq.s32.totalorder %s20, 1
      %p170 = por %p168, %p169
      %p171 = scmp.ne.s32.totalorder %s163, %s166
      %p172 = scmp.eq.s32.totalorder %s20, 0
      %p173 = por %p171, %p172
      %p174 = scmp.ne.s32.totalorder %s163, %s166
      %p175 = scmp.eq.s32.totalorder %s25, 1
      %p176 = por %p174, %p175
      %p177 = scmp.ne.s32.totalorder %s166, %s167
      %p178 = scmp.eq.s32.totalorder %s25, 0
      %p179 = por %p177, %p178
      %p180 = scmp.ne.s32.totalorder %s166, %s167
      %p181 = scmp.eq.s32.totalorder %s26, 1
      %p182 = por %p180, %p181
      %p184 = scmp.ne.s32.totalorder %s167, %s183
      %p185 = scmp.eq.s32.totalorder %s26, 0
      %p186 = por %p184, %p185
      %p187 = scmp.le.s32.totalorder 1, %s20
      %p188 = scmp.lt.s32.totalorder %s20, 3
      %p189 = pnand %p187, %p188
      %p190 = pneg %p189
      // Predicated region
      $region9: #{tpu_custom_call.1} parent=5 // pred_check
        _
      $region10: #{tpu_custom_call.1} parent=5 // pred_check_branch
        %192 = sbr.rel (%p189) target = $region12
      $region11: #{tpu_custom_call.1} parent=5 // pred_region
        %s193 = ssub.s32 %s20, 1
        // Predicated region
        $region13: #{tpu_custom_call.1} parent=11 // pred_check
          %p194 = pneg %p95
        $region14: #{tpu_custom_call.1} parent=11 // pred_check_branch
          %196 = sbr.rel (%p194) target = $region16
        $region15: #{tpu_custom_call.1} parent=11 // pred_region
          %s197 = smul.u32 32, %s32
          %p198 = scmp.lt.s32.totalorder %s197, 31
          %s199 = scalar_select %p198, %s197, 31
          %p200 = scmp.lt.s32.totalorder %s31, 0
          %s201 = scalar_select %p200, %s31, 0
          %s202 = sadd.s32 %s201, %s199
          %s203 = smul.addr %s202, 4
          %s204 = scalar_lea.vmem %s1, %s203
          %s205 = smul.u32 32, %s32
        $region16: #{tpu_custom_call.1} parent=11 // pred_fallthru
          _
      $region12: #{tpu_custom_call.1} parent=5 // pred_fallthru
        _
      %p206 = scmp.lt.s32.totalorder %s20, 2
      // Predicated region
      $region17: #{tpu_custom_call.1} parent=5 // pred_check
        %p207 = pneg %p206
      $region18: #{tpu_custom_call.1} parent=5 // pred_check_branch
        %209 = sbr.rel (%p207) target = $region20
      $region19: #{tpu_custom_call.1} parent=5 // pred_region
        // Predicated region
        $region21: #{tpu_custom_call.1} parent=19 // pred_check
          %p210 = pneg %p61
        $region22: #{tpu_custom_call.1} parent=19 // pred_check_branch
          %212 = sbr.rel (%p210) target = $region24
        $region23: #{tpu_custom_call.1} parent=19 // pred_region
          %s213 = sand.u32 %s51, 1
          %s214 = scalar_lea.sflag [#allocation4], %s213
          %s215 = sand.u32 %s51, 1
          %s216 = smul.addr %s215, 256
          %s217 = scalar_lea.vmem [#allocation3], %s216
          %s218 = smul.u32 32, %s27
          %s219 = smul.u32 2, %s29
          %s221 = ssub.s32 4096, 4096
          %222 = vsyncadd %s214, %s221
          %s223 = smul.addr %s218, 2
          %s224 = sadd.s32 %s219, %s223
          %s225 = smul.addr %s224, 64
          %s226 = scalar_lea.hbm %s0, %s225
          %s227 = sshll.u32 %s217, 4
          %s228 = int_to_ptr.vmem [resolvable:$true] %s227
          %233 = dma.hbm_to_vmem [thread:$0]  %s226, 4096, %s228, %s214, 128, 128, 8
        $region24: #{tpu_custom_call.1} parent=19 // pred_fallthru
          _
      $region20: #{tpu_custom_call.1} parent=5 // pred_fallthru
        _
      %p234 = scmp.le.s32.totalorder 1, %s20
      %p235 = scmp.lt.s32.totalorder %s20, 3
      %p236 = pnand %p234, %p235
      %p237 = pneg %p236
      // Predicated region
      $region25: #{tpu_custom_call.1} parent=5 // pred_check
        _
      $region26: #{tpu_custom_call.1} parent=5 // pred_check_branch
        %239 = sbr.rel (%p236) target = $region28
      $region27: #{tpu_custom_call.1} parent=5 // pred_region
        %s240 = ssub.s32 %s20, 1
        %s241 = sand.u32 %s54, 1
        %s242 = scalar_lea.sflag [#allocation4], %s241
        %s243 = sand.u32 %s54, 1
        %s244 = smul.addr %s243, 256
        %s245 = scalar_lea.vmem [#allocation3], %s244
        // Predicated region
        $region29: #{tpu_custom_call.1} parent=27 // pred_check
          %p246 = pneg %p67
        $region30: #{tpu_custom_call.1} parent=27 // pred_check_branch
          %248 = sbr.rel (%p246) target = $region32
        $region31: #{tpu_custom_call.1} parent=27 // pred_region
          %249 = dma.done %s242, 4096
        $region32: #{tpu_custom_call.1} parent=27 // pred_fallthru
          _
        %s250 = sand.u32 %s54, 1
        %s251 = scalar_lea.sflag [#allocation4], %s250
        %s252 = sand.u32 %s54, 1
        %s253 = smul.addr %s252, 256
        %s254 = scalar_lea.vmem [#allocation3], %s253
        %p255 = pneg %p67
        %p256 = pneg %p64
        %s257 = smul.u32 32, %s32
        %p258 = scmp.lt.s32.totalorder %s257, 31
        %s259 = scalar_select %p258, %s257, 31
        %p260 = scmp.lt.s32.totalorder %s31, 0
        %s261 = scalar_select %p260, %s31, 0
        %s262 = sadd.s32 %s261, %s259
        %s263 = smul.addr %s262, 4
        %s264 = scalar_lea.vmem %s1, %s263
        %p265 = pneg %p95
        %p266 = pneg %p92
        %p267 = pneg %p123
        %p268 = pneg %p120
        %s269 = smul.u32 32, %s30
        %p270 = scmp.lt.s32.totalorder %s269, 63
        %s271 = scalar_select %p270, %s269, 63
        %p272 = scmp.lt.s32.totalorder %s31, 0
        %s273 = scalar_select %p272, %s31, 0
        %s274 = sadd.s32 %s273, %s271
        %s275 = smul.addr %s274, 4
        %s276 = scalar_lea.vmem %s2, %s275
        %p277 = pneg %p151
        %p278 = pneg %p148
        %s279 = sand.u32 %s138, 1
        %s280 = scalar_lea.sflag [#allocation5], %s279
        %s281 = sand.u32 %s138, 1
        %s282 = smul.addr %s281, 8
        %s283 = scalar_lea.vmem [#allocation6], %s282
        %p284 = pneg %p179
        %p285 = pneg %p176
        %s286 = sand.u32 %s166, 1
        %s287 = scalar_lea.sflag [#allocation8], %s286
        %s288 = sand.u32 %s166, 1
        %s289 = smul.addr %s288, 8
        %s290 = scalar_lea.vmem [#allocation7], %s289
        %s291 = smul.u32 32, %s30
        %s292 = smul.u32 2, %s32
        %s293 = smul.u32 32, %s32
        %p294 = scmp.lt.s32.totalorder %s293, 31
        %s295 = scalar_select %p294, %s293, 31
        %p296 = scmp.lt.s32.totalorder %s31, 0
        %s297 = scalar_select %p296, %s31, 0
        %s298 = sadd.s32 %s297, %s295
        %s299 = smul.addr %s298, 4
        %s300 = scalar_lea.vmem %s1, %s299
        %s301 = smul.u32 32, %s32
        %s302 = smul.u32 32, %s30
        %p303 = scmp.lt.s32.totalorder %s302, 63
        %s304 = scalar_select %p303, %s302, 63
        %p305 = scmp.lt.s32.totalorder %s31, 0
        %s306 = scalar_select %p305, %s31, 0
        %s307 = sadd.s32 %s306, %s304
        %s308 = smul.addr %s307, 4
        %s309 = scalar_lea.vmem %s2, %s308
        %s310 = smul.u32 32, %s30
        %p312 = scmp.eq.s32.totalorder %s32, 0
        // Predicated region
        $region33: #{tpu_custom_call.1} parent=27 // pred_check
          %p313 = pneg %p312
        $region34: #{tpu_custom_call.1} parent=27 // pred_check_branch
          %315 = sbr.rel (%p313) target = $region36
        $region35: #{tpu_custom_call.1} parent=27 // pred_region
          %vm316 = vcmask 523264
          %317 = vst.msk [vmem:[#allocation2] sm:$0xff] %vm316, 0.0
          %318 = vst.msk [vmem:[#allocation2 + $0x8] sm:$0xff] %vm316, 0.0
          %319 = vst.msk [vmem:[#allocation2 + $0x10] sm:$0xff] %vm316, 0.0
          %320 = vst.msk [vmem:[#allocation2 + $0x18] sm:$0xff] %vm316, 0.0
          %321 = vst.msk [vmem:[#allocation2 + $0x20] sm:$0xff] %vm316, 0.0
          %322 = vst.msk [vmem:[#allocation2 + $0x28] sm:$0xff] %vm316, 0.0
          %323 = vst.msk [vmem:[#allocation2 + $0x30] sm:$0xff] %vm316, 0.0
          %324 = vst.msk [vmem:[#allocation2 + $0x38] sm:$0xff] %vm316, 0.0
          %325 = vst.msk [vmem:[#allocation2 + $0x40] sm:$0xff] %vm316, 0.0
          %326 = vst.msk [vmem:[#allocation2 + $0x48] sm:$0xff] %vm316, 0.0
          %327 = vst.msk [vmem:[#allocation2 + $0x50] sm:$0xff] %vm316, 0.0
          %328 = vst.msk [vmem:[#allocation2 + $0x58] sm:$0xff] %vm316, 0.0
          %329 = vst.msk [vmem:[#allocation2 + $0x60] sm:$0xff] %vm316, 0.0
          %330 = vst.msk [vmem:[#allocation2 + $0x68] sm:$0xff] %vm316, 0.0
          %331 = vst.msk [vmem:[#allocation2 + $0x70] sm:$0xff] %vm316, 0.0
          %332 = vst.msk [vmem:[#allocation2 + $0x78] sm:$0xff] %vm316, 0.0
          %333 = vst.msk [vmem:[#allocation2 + $0x80] sm:$0xff] %vm316, 0.0
          %334 = vst.msk [vmem:[#allocation2 + $0x88] sm:$0xff] %vm316, 0.0
          %335 = vst.msk [vmem:[#allocation2 + $0x90] sm:$0xff] %vm316, 0.0
          %336 = vst.msk [vmem:[#allocation2 + $0x98] sm:$0xff] %vm316, 0.0
          %337 = vst.msk [vmem:[#allocation2 + $0xa0] sm:$0xff] %vm316, 0.0
          %338 = vst.msk [vmem:[#allocation2 + $0xa8] sm:$0xff] %vm316, 0.0
          %339 = vst.msk [vmem:[#allocation2 + $0xb0] sm:$0xff] %vm316, 0.0
          %340 = vst.msk [vmem:[#allocation2 + $0xb8] sm:$0xff] %vm316, 0.0
          %341 = vst.msk [vmem:[#allocation2 + $0xc0] sm:$0xff] %vm316, 0.0
          %342 = vst.msk [vmem:[#allocation2 + $0xc8] sm:$0xff] %vm316, 0.0
          %343 = vst.msk [vmem:[#allocation2 + $0xd0] sm:$0xff] %vm316, 0.0
          %344 = vst.msk [vmem:[#allocation2 + $0xd8] sm:$0xff] %vm316, 0.0
          %345 = vst.msk [vmem:[#allocation2 + $0xe0] sm:$0xff] %vm316, 0.0
          %346 = vst.msk [vmem:[#allocation2 + $0xe8] sm:$0xff] %vm316, 0.0
          %347 = vst.msk [vmem:[#allocation2 + $0xf0] sm:$0xff] %vm316, 0.0
          %348 = vst.msk [vmem:[#allocation2 + $0xf8] sm:$0xff] %vm316, 0.0
        $region36: #{tpu_custom_call.1} parent=27 // pred_fallthru
          _
        %v349 = vld [vmem:[#allocation2] sm:$0xff]
        %v350 = vld [vmem:[#allocation2 + $0x8] sm:$0xff]
        %v351 = vld [vmem:[#allocation2 + $0x10] sm:$0xff]
        %v352 = vld [vmem:[#allocation2 + $0x18] sm:$0xff]
        %v353 = vld [vmem:[#allocation2 + $0x20] sm:$0xff]
        %v354 = vld [vmem:[#allocation2 + $0x28] sm:$0xff]
        %v355 = vld [vmem:[#allocation2 + $0x30] sm:$0xff]
        %v356 = vld [vmem:[#allocation2 + $0x38] sm:$0xff]
        %v357 = vld [vmem:[#allocation2 + $0x40] sm:$0xff]
        %v358 = vld [vmem:[#allocation2 + $0x48] sm:$0xff]
        %v359 = vld [vmem:[#allocation2 + $0x50] sm:$0xff]
        %v360 = vld [vmem:[#allocation2 + $0x58] sm:$0xff]
        %v361 = vld [vmem:[#allocation2 + $0x60] sm:$0xff]
        %v362 = vld [vmem:[#allocation2 + $0x68] sm:$0xff]
        %v363 = vld [vmem:[#allocation2 + $0x70] sm:$0xff]
        %v364 = vld [vmem:[#allocation2 + $0x78] sm:$0xff]
        %v365 = vld [vmem:[#allocation2 + $0x80] sm:$0xff]
        %v366 = vld [vmem:[#allocation2 + $0x88] sm:$0xff]
        %v367 = vld [vmem:[#allocation2 + $0x90] sm:$0xff]
        %v368 = vld [vmem:[#allocation2 + $0x98] sm:$0xff]
        %v369 = vld [vmem:[#allocation2 + $0xa0] sm:$0xff]
        %v370 = vld [vmem:[#allocation2 + $0xa8] sm:$0xff]
        %v371 = vld [vmem:[#allocation2 + $0xb0] sm:$0xff]
        %v372 = vld [vmem:[#allocation2 + $0xb8] sm:$0xff]
        %v373 = vld [vmem:[#allocation2 + $0xc0] sm:$0xff]
        %v374 = vld [vmem:[#allocation2 + $0xc8] sm:$0xff]
        %v375 = vld [vmem:[#allocation2 + $0xd0] sm:$0xff]
        %v376 = vld [vmem:[#allocation2 + $0xd8] sm:$0xff]
        %v377 = vld [vmem:[#allocation2 + $0xe0] sm:$0xff]
        %v378 = vld [vmem:[#allocation2 + $0xe8] sm:$0xff]
        %v379 = vld [vmem:[#allocation2 + $0xf0] sm:$0xff]
        %v380 = vld [vmem:[#allocation2 + $0xf8] sm:$0xff]
        %v381 = vld [vmem:[%s245] sm:$0xff]
        %v382 = vld [vmem:[%s245 + $0x8] sm:$0xff]
        %v383 = vld [vmem:[%s245 + $0x10] sm:$0xff]
        %v384 = vld [vmem:[%s245 + $0x18] sm:$0xff]
        %v385 = vld [vmem:[%s245 + $0x20] sm:$0xff]
        %v386 = vld [vmem:[%s245 + $0x28] sm:$0xff]
        %v387 = vld [vmem:[%s245 + $0x30] sm:$0xff]
        %v388 = vld [vmem:[%s245 + $0x38] sm:$0xff]
        %v389 = vld [vmem:[%s245 + $0x40] sm:$0xff]
        %v390 = vld [vmem:[%s245 + $0x48] sm:$0xff]
        %v391 = vld [vmem:[%s245 + $0x50] sm:$0xff]
        %v392 = vld [vmem:[%s245 + $0x58] sm:$0xff]
        %v393 = vld [vmem:[%s245 + $0x60] sm:$0xff]
        %v394 = vld [vmem:[%s245 + $0x68] sm:$0xff]
        %v395 = vld [vmem:[%s245 + $0x70] sm:$0xff]
        %v396 = vld [vmem:[%s245 + $0x78] sm:$0xff]
        %v397 = vld [vmem:[%s245 + $0x80] sm:$0xff]
        %v398 = vld [vmem:[%s245 + $0x88] sm:$0xff]
        %v399 = vld [vmem:[%s245 + $0x90] sm:$0xff]
        %v400 = vld [vmem:[%s245 + $0x98] sm:$0xff]
        %v401 = vld [vmem:[%s245 + $0xa0] sm:$0xff]
        %v402 = vld [vmem:[%s245 + $0xa8] sm:$0xff]
        %v403 = vld [vmem:[%s245 + $0xb0] sm:$0xff]
        %v404 = vld [vmem:[%s245 + $0xb8] sm:$0xff]
        %v405 = vld [vmem:[%s245 + $0xc0] sm:$0xff]
        %v406 = vld [vmem:[%s245 + $0xc8] sm:$0xff]
        %v407 = vld [vmem:[%s245 + $0xd0] sm:$0xff]
        %v408 = vld [vmem:[%s245 + $0xd8] sm:$0xff]
        %v409 = vld [vmem:[%s245 + $0xe0] sm:$0xff]
        %v410 = vld [vmem:[%s245 + $0xe8] sm:$0xff]
        %v411 = vld [vmem:[%s245 + $0xf0] sm:$0xff]
        %v412 = vld [vmem:[%s245 + $0xf8] sm:$0xff]
        %v413 = vld [vmem:[%s300] sm:$0xf]
        %v414 = vld [vmem:[%s300 + $0x4] sm:$0xf]
        %v415 = vld [vmem:[%s300 + $0x8] sm:$0xf]
        %v416 = vld [vmem:[%s300 + $0xc] sm:$0xf]
        %v417 = vld [vmem:[%s300 + $0x10] sm:$0xf]
        %v418 = vld [vmem:[%s300 + $0x14] sm:$0xf]
        %v419 = vld [vmem:[%s300 + $0x18] sm:$0xf]
        %v420 = vld [vmem:[%s300 + $0x1c] sm:$0xf]
        %v421 = vld [vmem:[%s300 + $0x20] sm:$0xf]
        %v422 = vld [vmem:[%s300 + $0x24] sm:$0xf]
        %v423 = vld [vmem:[%s300 + $0x28] sm:$0xf]
        %v424 = vld [vmem:[%s300 + $0x2c] sm:$0xf]
        %v425 = vld [vmem:[%s300 + $0x30] sm:$0xf]
        %v426 = vld [vmem:[%s300 + $0x34] sm:$0xf]
        %v427 = vld [vmem:[%s300 + $0x38] sm:$0xf]
        %v428 = vld [vmem:[%s300 + $0x3c] sm:$0xf]
        %v429 = vld [vmem:[%s300 + $0x40] sm:$0xf]
        %v430 = vld [vmem:[%s300 + $0x44] sm:$0xf]
        %v431 = vld [vmem:[%s300 + $0x48] sm:$0xf]
        %v432 = vld [vmem:[%s300 + $0x4c] sm:$0xf]
        %v433 = vld [vmem:[%s300 + $0x50] sm:$0xf]
        %v434 = vld [vmem:[%s300 + $0x54] sm:$0xf]
        %v435 = vld [vmem:[%s300 + $0x58] sm:$0xf]
        %v436 = vld [vmem:[%s300 + $0x5c] sm:$0xf]
        %v437 = vld [vmem:[%s300 + $0x60] sm:$0xf]
        %v438 = vld [vmem:[%s300 + $0x64] sm:$0xf]
        %v439 = vld [vmem:[%s300 + $0x68] sm:$0xf]
        %v440 = vld [vmem:[%s300 + $0x6c] sm:$0xf]
        %v441 = vld [vmem:[%s300 + $0x70] sm:$0xf]
        %v442 = vld [vmem:[%s300 + $0x74] sm:$0xf]
        %v443 = vld [vmem:[%s300 + $0x78] sm:$0xf]
        %v444 = vld [vmem:[%s300 + $0x7c] sm:$0xf]
        %v477 = vunpack.c.l.b16 %v381
        %v478 = vunpack.c.h.b16 %v381
        %v479 = vunpack.c.l.b16 %v382
        %v480 = vunpack.c.h.b16 %v382
        %v481 = vunpack.c.l.b16 %v383
        %v482 = vunpack.c.h.b16 %v383
        %v483 = vunpack.c.l.b16 %v384
        %v484 = vunpack.c.h.b16 %v384
        %v485 = vunpack.c.l.b16 %v385
        %v486 = vunpack.c.h.b16 %v385
        %v487 = vunpack.c.l.b16 %v386
        %v488 = vunpack.c.h.b16 %v386
        %v489 = vunpack.c.l.b16 %v387
        %v490 = vunpack.c.h.b16 %v387
        %v491 = vunpack.c.l.b16 %v388
        %v492 = vunpack.c.h.b16 %v388
        %v493 = vunpack.c.l.b16 %v389
        %v494 = vunpack.c.h.b16 %v389
        %v495 = vunpack.c.l.b16 %v390
        %v496 = vunpack.c.h.b16 %v390
        %v497 = vunpack.c.l.b16 %v391
        %v498 = vunpack.c.h.b16 %v391
        %v499 = vunpack.c.l.b16 %v392
        %v500 = vunpack.c.h.b16 %v392
        %v501 = vunpack.c.l.b16 %v393
        %v502 = vunpack.c.h.b16 %v393
        %v503 = vunpack.c.l.b16 %v394
        %v504 = vunpack.c.h.b16 %v394
        %v505 = vunpack.c.l.b16 %v395
        %v506 = vunpack.c.h.b16 %v395
        %v507 = vunpack.c.l.b16 %v396
        %v508 = vunpack.c.h.b16 %v396
        %v509 = vunpack.c.l.b16 %v397
        %v510 = vunpack.c.h.b16 %v397
        %v511 = vunpack.c.l.b16 %v398
        %v512 = vunpack.c.h.b16 %v398
        %v513 = vunpack.c.l.b16 %v399
        %v514 = vunpack.c.h.b16 %v399
        %v515 = vunpack.c.l.b16 %v400
        %v516 = vunpack.c.h.b16 %v400
        %v517 = vunpack.c.l.b16 %v401
        %v518 = vunpack.c.h.b16 %v401
        %v519 = vunpack.c.l.b16 %v402
        %v520 = vunpack.c.h.b16 %v402
        %v521 = vunpack.c.l.b16 %v403
        %v522 = vunpack.c.h.b16 %v403
        %v523 = vunpack.c.l.b16 %v404
        %v524 = vunpack.c.h.b16 %v404
        %v525 = vunpack.c.l.b16 %v405
        %v526 = vunpack.c.h.b16 %v405
        %v527 = vunpack.c.l.b16 %v406
        %v528 = vunpack.c.h.b16 %v406
        %v529 = vunpack.c.l.b16 %v407
        %v530 = vunpack.c.h.b16 %v407
        %v531 = vunpack.c.l.b16 %v408
        %v532 = vunpack.c.h.b16 %v408
        %v533 = vunpack.c.l.b16 %v409
        %v534 = vunpack.c.h.b16 %v409
        %v535 = vunpack.c.l.b16 %v410
        %v536 = vunpack.c.h.b16 %v410
        %v537 = vunpack.c.l.b16 %v411
        %v538 = vunpack.c.h.b16 %v411
        %v539 = vunpack.c.l.b16 %v412
        %v540 = vunpack.c.h.b16 %v412
        %v541 = vpack.c.b16 %v479, %v477
        %v542 = vpack.c.b16 %v480, %v478
        %v543 = vpack.c.b16 %v483, %v481
        %v544 = vpack.c.b16 %v484, %v482
        %v545 = vpack.c.b16 %v487, %v485
        %v546 = vpack.c.b16 %v488, %v486
        %v547 = vpack.c.b16 %v491, %v489
        %v548 = vpack.c.b16 %v492, %v490
        %v549 = vpack.c.b16 %v495, %v493
        %v550 = vpack.c.b16 %v496, %v494
        %v551 = vpack.c.b16 %v499, %v497
        %v552 = vpack.c.b16 %v500, %v498
        %v553 = vpack.c.b16 %v503, %v501
        %v554 = vpack.c.b16 %v504, %v502
        %v555 = vpack.c.b16 %v507, %v505
        %v556 = vpack.c.b16 %v508, %v506
        %v557 = vpack.c.b16 %v511, %v509
        %v558 = vpack.c.b16 %v512, %v510
        %v559 = vpack.c.b16 %v515, %v513
        %v560 = vpack.c.b16 %v516, %v514
        %v561 = vpack.c.b16 %v519, %v517
        %v562 = vpack.c.b16 %v520, %v518
        %v563 = vpack.c.b16 %v523, %v521
        %v564 = vpack.c.b16 %v524, %v522
        %v565 = vpack.c.b16 %v527, %v525
        %v566 = vpack.c.b16 %v528, %v526
        %v567 = vpack.c.b16 %v531, %v529
        %v568 = vpack.c.b16 %v532, %v530
        %v569 = vpack.c.b16 %v535, %v533
        %v570 = vpack.c.b16 %v536, %v534
        %v571 = vpack.c.b16 %v539, %v537
        %v572 = vpack.c.b16 %v540, %v538
        %v637 = vunpack.c.l.b16 %v413
        %v638 = vunpack.c.l.b16 %v414
        %v639 = vunpack.c.l.b16 %v415
        %v640 = vunpack.c.l.b16 %v416
        %v641 = vunpack.c.l.b16 %v417
        %v642 = vunpack.c.l.b16 %v418
        %v643 = vunpack.c.l.b16 %v419
        %v644 = vunpack.c.l.b16 %v420
        %v645 = vunpack.c.l.b16 %v421
        %v646 = vunpack.c.l.b16 %v422
        %v647 = vunpack.c.l.b16 %v423
        %v648 = vunpack.c.l.b16 %v424
        %v649 = vunpack.c.l.b16 %v425
        %v650 = vunpack.c.l.b16 %v426
        %v651 = vunpack.c.l.b16 %v427
        %v652 = vunpack.c.l.b16 %v428
        %v653 = vunpack.c.l.b16 %v429
        %v654 = vunpack.c.l.b16 %v430
        %v655 = vunpack.c.l.b16 %v431
        %v656 = vunpack.c.l.b16 %v432
        %v657 = vunpack.c.l.b16 %v433
        %v658 = vunpack.c.l.b16 %v434
        %v659 = vunpack.c.l.b16 %v435
        %v660 = vunpack.c.l.b16 %v436
        %v661 = vunpack.c.l.b16 %v437
        %v662 = vunpack.c.l.b16 %v438
        %v663 = vunpack.c.l.b16 %v439
        %v664 = vunpack.c.l.b16 %v440
        %v665 = vunpack.c.l.b16 %v441
        %v666 = vunpack.c.l.b16 %v442
        %v667 = vunpack.c.l.b16 %v443
        %v668 = vunpack.c.l.b16 %v444
        %v669 = vpack.c.b16 %v638, %v637
        %v670 = vpack.c.b16 %v640, %v639
        %v671 = vpack.c.b16 %v642, %v641
        %v672 = vpack.c.b16 %v644, %v643
        %v673 = vpack.c.b16 %v646, %v645
        %v674 = vpack.c.b16 %v648, %v647
        %v675 = vpack.c.b16 %v650, %v649
        %v676 = vpack.c.b16 %v652, %v651
        %v677 = vpack.c.b16 %v654, %v653
        %v678 = vpack.c.b16 %v656, %v655
        %v679 = vpack.c.b16 %v658, %v657
        %v680 = vpack.c.b16 %v660, %v659
        %v681 = vpack.c.b16 %v662, %v661
        %v682 = vpack.c.b16 %v664, %v663
        %v683 = vpack.c.b16 %v666, %v665
        %v684 = vpack.c.b16 %v668, %v667
        %701 = vmatprep.subr.bf16.mxu0 0
        %702 = vmatpush1.bf16.msra.mxu0 %v676
        %703 = vmatprep.subr.bf16.mxu0 0
        %704 = vmatpush1.bf16.msra.mxu0 %v675
        %705 = vmatprep.subr.bf16.mxu0 0
        %706 = vmatpush1.bf16.msra.mxu0 %v674
        %707 = vmatprep.subr.bf16.mxu0 0
        %708 = vmatpush1.bf16.msra.mxu0 %v673
        %709 = vmatprep.subr.bf16.mxu0 0
        %710 = vmatpush1.bf16.msra.mxu0 %v672
        %711 = vmatprep.subr.bf16.mxu0 0
        %712 = vmatpush1.bf16.msra.mxu0 %v671
        %713 = vmatprep.subr.bf16.mxu0 0
        %714 = vmatpush1.bf16.msra.mxu0 %v670
        %715 = vmatprep.subr.bf16.mxu0 0
        %716 = vmatpush1.bf16.msra.mxu0 %v669
        %717 = vmatprep.subr.bf16.mxu0 0
        %718 = vmatpush2.bf16.msra.mxu0 %v684
        %719 = vmatprep.subr.bf16.mxu0 0
        %720 = vmatpush2.bf16.msra.mxu0 %v683
        %721 = vmatprep.subr.bf16.mxu0 0
        %722 = vmatpush2.bf16.msra.mxu0 %v682
        %723 = vmatprep.subr.bf16.mxu0 0
        %724 = vmatpush2.bf16.msra.mxu0 %v681
        %725 = vmatprep.subr.bf16.mxu0 0
        %726 = vmatpush2.bf16.msra.mxu0 %v680
        %727 = vmatprep.subr.bf16.mxu0 0
        %728 = vmatpush2.bf16.msra.mxu0 %v679
        %729 = vmatprep.subr.bf16.mxu0 0
        %730 = vmatpush2.bf16.msra.mxu0 %v678
        %731 = vmatprep.subr.bf16.mxu0 0
        %732 = vmatpush2.bf16.msra.mxu0 %v677
        %733 = vmatprep.mubr.bf16.mxu0 %v542
        %734 = vmatmul.mubr.bf16.gmra.mxu0 %v541
        %v735 = vpop.f32.mrf.mxu0
        %v736 = vadd.f32 0.0, %v735
        %v737 = vpop.f32.mrf.mxu0
        %v738 = vpop.f32.mrf.mxu0
        %v739 = vadd.f32 0.0, %v738
        %v740 = vpop.f32.mrf.mxu0
        %741 = vmatprep.mubr.bf16.mxu0 %v544
        %742 = vmatmul.mubr.bf16.gmra.mxu0 %v543
        %v743 = vpop.f32.mrf.mxu0
        %v744 = vadd.f32 0.0, %v743
        %v745 = vpop.f32.mrf.mxu0
        %v746 = vpop.f32.mrf.mxu0
        %v747 = vadd.f32 0.0, %v746
        %v748 = vpop.f32.mrf.mxu0
        %749 = vmatprep.mubr.bf16.mxu0 %v546
        %750 = vmatmul.mubr.bf16.gmra.mxu0 %v545
        %v751 = vpop.f32.mrf.mxu0
        %v752 = vadd.f32 0.0, %v751
        %v753 = vpop.f32.mrf.mxu0
        %v754 = vpop.f32.mrf.mxu0
        %v755 = vadd.f32 0.0, %v754
        %v756 = vpop.f32.mrf.mxu0
        %757 = vmatprep.mubr.bf16.mxu0 %v548
        %758 = vmatmul.mubr.bf16.gmra.mxu0 %v547
        %v759 = vpop.f32.mrf.mxu0
        %v760 = vadd.f32 0.0, %v759
        %v761 = vpop.f32.mrf.mxu0
        %v762 = vpop.f32.mrf.mxu0
        %v763 = vadd.f32 0.0, %v762
        %v764 = vpop.f32.mrf.mxu0
        %765 = vmatprep.mubr.bf16.mxu0 %v550
        %766 = vmatmul.mubr.bf16.gmra.mxu0 %v549
        %v767 = vpop.f32.mrf.mxu0
        %v768 = vadd.f32 0.0, %v767
        %v769 = vpop.f32.mrf.mxu0
        %v770 = vpop.f32.mrf.mxu0
        %v771 = vadd.f32 0.0, %v770
        %v772 = vpop.f32.mrf.mxu0
        %773 = vmatprep.mubr.bf16.mxu0 %v552
        %774 = vmatmul.mubr.bf16.gmra.mxu0 %v551
        %v775 = vpop.f32.mrf.mxu0
        %v776 = vadd.f32 0.0, %v775
        %v777 = vpop.f32.mrf.mxu0
        %v778 = vpop.f32.mrf.mxu0
        %v779 = vadd.f32 0.0, %v778
        %v780 = vpop.f32.mrf.mxu0
        %781 = vmatprep.mubr.bf16.mxu0 %v554
        %782 = vmatmul.mubr.bf16.gmra.mxu0 %v553
        %v783 = vpop.f32.mrf.mxu0
        %v784 = vadd.f32 0.0, %v783
        %v785 = vpop.f32.mrf.mxu0
        %v786 = vpop.f32.mrf.mxu0
        %v787 = vadd.f32 0.0, %v786
        %v788 = vpop.f32.mrf.mxu0
        %789 = vmatprep.mubr.bf16.mxu0 %v556
        %790 = vmatmul.mubr.bf16.gmra.mxu0 %v555
        %v791 = vpop.f32.mrf.mxu0
        %v792 = vadd.f32 0.0, %v791
        %v793 = vpop.f32.mrf.mxu0
        %v794 = vpop.f32.mrf.mxu0
        %v795 = vadd.f32 0.0, %v794
        %v796 = vpop.f32.mrf.mxu0
        %797 = vmatprep.mubr.bf16.mxu0 %v558
        %798 = vmatmul.mubr.bf16.gmra.mxu0 %v557
        %v799 = vpop.f32.mrf.mxu0
        %v800 = vadd.f32 0.0, %v799
        %v801 = vpop.f32.mrf.mxu0
        %v802 = vpop.f32.mrf.mxu0
        %v803 = vadd.f32 0.0, %v802
        %v804 = vpop.f32.mrf.mxu0
        %805 = vmatprep.mubr.bf16.mxu0 %v560
        %806 = vmatmul.mubr.bf16.gmra.mxu0 %v559
        %v807 = vpop.f32.mrf.mxu0
        %v808 = vadd.f32 0.0, %v807
        %v809 = vpop.f32.mrf.mxu0
        %v810 = vpop.f32.mrf.mxu0
        %v811 = vadd.f32 0.0, %v810
        %v812 = vpop.f32.mrf.mxu0
        %813 = vmatprep.mubr.bf16.mxu0 %v562
        %814 = vmatmul.mubr.bf16.gmra.mxu0 %v561
        %v815 = vpop.f32.mrf.mxu0
        %v816 = vadd.f32 0.0, %v815
        %v817 = vpop.f32.mrf.mxu0
        %v818 = vpop.f32.mrf.mxu0
        %v819 = vadd.f32 0.0, %v818
        %v820 = vpop.f32.mrf.mxu0
        %821 = vmatprep.mubr.bf16.mxu0 %v564
        %822 = vmatmul.mubr.bf16.gmra.mxu0 %v563
        %v823 = vpop.f32.mrf.mxu0
        %v824 = vadd.f32 0.0, %v823
        %v825 = vpop.f32.mrf.mxu0
        %v826 = vpop.f32.mrf.mxu0
        %v827 = vadd.f32 0.0, %v826
        %v828 = vpop.f32.mrf.mxu0
        %829 = vmatprep.mubr.bf16.mxu0 %v566
        %830 = vmatmul.mubr.bf16.gmra.mxu0 %v565
        %v831 = vpop.f32.mrf.mxu0
        %v832 = vadd.f32 0.0, %v831
        %v833 = vpop.f32.mrf.mxu0
        %v834 = vpop.f32.mrf.mxu0
        %v835 = vadd.f32 0.0, %v834
        %v836 = vpop.f32.mrf.mxu0
        %837 = vmatprep.mubr.bf16.mxu0 %v568
        %838 = vmatmul.mubr.bf16.gmra.mxu0 %v567
        %v839 = vpop.f32.mrf.mxu0
        %v840 = vadd.f32 0.0, %v839
        %v841 = vpop.f32.mrf.mxu0
        %v842 = vpop.f32.mrf.mxu0
        %v843 = vadd.f32 0.0, %v842
        %v844 = vpop.f32.mrf.mxu0
        %845 = vmatprep.mubr.bf16.mxu0 %v570
        %846 = vmatmul.mubr.bf16.gmra.mxu0 %v569
        %v847 = vpop.f32.mrf.mxu0
        %v848 = vadd.f32 0.0, %v847
        %v849 = vpop.f32.mrf.mxu0
        %v850 = vpop.f32.mrf.mxu0
        %v851 = vadd.f32 0.0, %v850
        %v852 = vpop.f32.mrf.mxu0
        %853 = vmatprep.mubr.bf16.mxu0 %v572
        %854 = vmatmul.mubr.bf16.gmra.mxu0 %v571
        %v855 = vpop.f32.mrf.mxu0
        %v856 = vadd.f32 0.0, %v855
        %v857 = vpop.f32.mrf.mxu0
        %v858 = vpop.f32.mrf.mxu0
        %v859 = vadd.f32 0.0, %v858
        %v860 = vpop.f32.mrf.mxu0
        %861 = vdwg.mxu0
        %v862 = vadd.f32 %v349, %v736
        %v863 = vadd.f32 %v350, %v739
        %v864 = vadd.f32 %v351, %v744
        %v865 = vadd.f32 %v352, %v747
        %v866 = vadd.f32 %v353, %v752
        %v867 = vadd.f32 %v354, %v755
        %v868 = vadd.f32 %v355, %v760
        %v869 = vadd.f32 %v356, %v763
        %v870 = vadd.f32 %v357, %v768
        %v871 = vadd.f32 %v358, %v771
        %v872 = vadd.f32 %v359, %v776
        %v873 = vadd.f32 %v360, %v779
        %v874 = vadd.f32 %v361, %v784
        %v875 = vadd.f32 %v362, %v787
        %v876 = vadd.f32 %v363, %v792
        %v877 = vadd.f32 %v364, %v795
        %v878 = vadd.f32 %v365, %v800
        %v879 = vadd.f32 %v366, %v803
        %v880 = vadd.f32 %v367, %v808
        %v881 = vadd.f32 %v368, %v811
        %v882 = vadd.f32 %v369, %v816
        %v883 = vadd.f32 %v370, %v819
        %v884 = vadd.f32 %v371, %v824
        %v885 = vadd.f32 %v372, %v827
        %v886 = vadd.f32 %v373, %v832
        %v887 = vadd.f32 %v374, %v835
        %v888 = vadd.f32 %v375, %v840
        %v889 = vadd.f32 %v376, %v843
        %v890 = vadd.f32 %v377, %v848
        %v891 = vadd.f32 %v378, %v851
        %v892 = vadd.f32 %v379, %v856
        %v893 = vadd.f32 %v380, %v859
        %vm894 = vcmask 523264
        %895 = vst.msk [vmem:[#allocation2] sm:$0xff] %vm894, %v862
        %896 = vst.msk [vmem:[#allocation2 + $0x8] sm:$0xff] %vm894, %v863
        %897 = vst.msk [vmem:[#allocation2 + $0x10] sm:$0xff] %vm894, %v864
        %898 = vst.msk [vmem:[#allocation2 + $0x18] sm:$0xff] %vm894, %v865
        %899 = vst.msk [vmem:[#allocation2 + $0x20] sm:$0xff] %vm894, %v866
        %900 = vst.msk [vmem:[#allocation2 + $0x28] sm:$0xff] %vm894, %v867
        %901 = vst.msk [vmem:[#allocation2 + $0x30] sm:$0xff] %vm894, %v868
        %902 = vst.msk [vmem:[#allocation2 + $0x38] sm:$0xff] %vm894, %v869
        %903 = vst.msk [vmem:[#allocation2 + $0x40] sm:$0xff] %vm894, %v870
        %904 = vst.msk [vmem:[#allocation2 + $0x48] sm:$0xff] %vm894, %v871
        %905 = vst.msk [vmem:[#allocation2 + $0x50] sm:$0xff] %vm894, %v872
        %906 = vst.msk [vmem:[#allocation2 + $0x58] sm:$0xff] %vm894, %v873
        %907 = vst.msk [vmem:[#allocation2 + $0x60] sm:$0xff] %vm894, %v874
        %908 = vst.msk [vmem:[#allocation2 + $0x68] sm:$0xff] %vm894, %v875
        %909 = vst.msk [vmem:[#allocation2 + $0x70] sm:$0xff] %vm894, %v876
        %910 = vst.msk [vmem:[#allocation2 + $0x78] sm:$0xff] %vm894, %v877
        %911 = vst.msk [vmem:[#allocation2 + $0x80] sm:$0xff] %vm894, %v878
        %912 = vst.msk [vmem:[#allocation2 + $0x88] sm:$0xff] %vm894, %v879
        %913 = vst.msk [vmem:[#allocation2 + $0x90] sm:$0xff] %vm894, %v880
        %914 = vst.msk [vmem:[#allocation2 + $0x98] sm:$0xff] %vm894, %v881
        %915 = vst.msk [vmem:[#allocation2 + $0xa0] sm:$0xff] %vm894, %v882
        %916 = vst.msk [vmem:[#allocation2 + $0xa8] sm:$0xff] %vm894, %v883
        %917 = vst.msk [vmem:[#allocation2 + $0xb0] sm:$0xff] %vm894, %v884
        %918 = vst.msk [vmem:[#allocation2 + $0xb8] sm:$0xff] %vm894, %v885
        %919 = vst.msk [vmem:[#allocation2 + $0xc0] sm:$0xff] %vm894, %v886
        %920 = vst.msk [vmem:[#allocation2 + $0xc8] sm:$0xff] %vm894, %v887
        %921 = vst.msk [vmem:[#allocation2 + $0xd0] sm:$0xff] %vm894, %v888
        %922 = vst.msk [vmem:[#allocation2 + $0xd8] sm:$0xff] %vm894, %v889
        %923 = vst.msk [vmem:[#allocation2 + $0xe0] sm:$0xff] %vm894, %v890
        %924 = vst.msk [vmem:[#allocation2 + $0xe8] sm:$0xff] %vm894, %v891
        %925 = vst.msk [vmem:[#allocation2 + $0xf0] sm:$0xff] %vm894, %v892
        %926 = vst.msk [vmem:[#allocation2 + $0xf8] sm:$0xff] %vm894, %v893
        // Predicated region
        $region37: #{tpu_custom_call.1} parent=27 // pred_check
          %p927 = pneg %p312
        $region38: #{tpu_custom_call.1} parent=27 // pred_check_branch
          %929 = sbr.rel (%p927) target = $region40
        $region39: #{tpu_custom_call.1} parent=27 // pred_region
          %v930 = vld [vmem:[#allocation2] sm:$0xff]
          %v931 = vld [vmem:[#allocation2 + $0x8] sm:$0xff]
          %v932 = vld [vmem:[#allocation2 + $0x10] sm:$0xff]
          %v933 = vld [vmem:[#allocation2 + $0x18] sm:$0xff]
          %v934 = vld [vmem:[#allocation2 + $0x20] sm:$0xff]
          %v935 = vld [vmem:[#allocation2 + $0x28] sm:$0xff]
          %v936 = vld [vmem:[#allocation2 + $0x30] sm:$0xff]
          %v937 = vld [vmem:[#allocation2 + $0x38] sm:$0xff]
          %v938 = vld [vmem:[#allocation2 + $0x40] sm:$0xff]
          %v939 = vld [vmem:[#allocation2 + $0x48] sm:$0xff]
          %v940 = vld [vmem:[#allocation2 + $0x50] sm:$0xff]
          %v941 = vld [vmem:[#allocation2 + $0x58] sm:$0xff]
          %v942 = vld [vmem:[#allocation2 + $0x60] sm:$0xff]
          %v943 = vld [vmem:[#allocation2 + $0x68] sm:$0xff]
          %v944 = vld [vmem:[#allocation2 + $0x70] sm:$0xff]
          %v945 = vld [vmem:[#allocation2 + $0x78] sm:$0xff]
          %v946 = vld [vmem:[#allocation2 + $0x80] sm:$0xff]
          %v947 = vld [vmem:[#allocation2 + $0x88] sm:$0xff]
          %v948 = vld [vmem:[#allocation2 + $0x90] sm:$0xff]
          %v949 = vld [vmem:[#allocation2 + $0x98] sm:$0xff]
          %v950 = vld [vmem:[#allocation2 + $0xa0] sm:$0xff]
          %v951 = vld [vmem:[#allocation2 + $0xa8] sm:$0xff]
          %v952 = vld [vmem:[#allocation2 + $0xb0] sm:$0xff]
          %v953 = vld [vmem:[#allocation2 + $0xb8] sm:$0xff]
          %v954 = vld [vmem:[#allocation2 + $0xc0] sm:$0xff]
          %v955 = vld [vmem:[#allocation2 + $0xc8] sm:$0xff]
          %v956 = vld [vmem:[#allocation2 + $0xd0] sm:$0xff]
          %v957 = vld [vmem:[#allocation2 + $0xd8] sm:$0xff]
          %v958 = vld [vmem:[#allocation2 + $0xe0] sm:$0xff]
          %v959 = vld [vmem:[#allocation2 + $0xe8] sm:$0xff]
          %v960 = vld [vmem:[#allocation2 + $0xf0] sm:$0xff]
          %v961 = vld [vmem:[#allocation2 + $0xf8] sm:$0xff]
          %v962 = vpack.c.bf16 %v931, %v930
          %v963 = vpack.c.bf16 %v933, %v932
          %v964 = vpack.c.bf16 %v935, %v934
          %v965 = vpack.c.bf16 %v937, %v936
          %v966 = vpack.c.bf16 %v939, %v938
          %v967 = vpack.c.bf16 %v941, %v940
          %v968 = vpack.c.bf16 %v943, %v942
          %v969 = vpack.c.bf16 %v945, %v944
          %v970 = vpack.c.bf16 %v947, %v946
          %v971 = vpack.c.bf16 %v949, %v948
          %v972 = vpack.c.bf16 %v951, %v950
          %v973 = vpack.c.bf16 %v953, %v952
          %v974 = vpack.c.bf16 %v955, %v954
          %v975 = vpack.c.bf16 %v957, %v956
          %v976 = vpack.c.bf16 %v959, %v958
          %v977 = vpack.c.bf16 %v961, %v960
          %v994 = vunpack.c.l.b16 %v962
          %v995 = vunpack.c.h.b16 %v962
          %v996 = vunpack.c.l.b16 %v963
          %v997 = vunpack.c.h.b16 %v963
          %v998 = vunpack.c.l.b16 %v964
          %v999 = vunpack.c.h.b16 %v964
          %v1000 = vunpack.c.l.b16 %v965
          %v1001 = vunpack.c.h.b16 %v965
          %v1002 = vunpack.c.l.b16 %v966
          %v1003 = vunpack.c.h.b16 %v966
          %v1004 = vunpack.c.l.b16 %v967
          %v1005 = vunpack.c.h.b16 %v967
          %v1006 = vunpack.c.l.b16 %v968
          %v1007 = vunpack.c.h.b16 %v968
          %v1008 = vunpack.c.l.b16 %v969
          %v1009 = vunpack.c.h.b16 %v969
          %v1010 = vunpack.c.l.b16 %v970
          %v1011 = vunpack.c.h.b16 %v970
          %v1012 = vunpack.c.l.b16 %v971
          %v1013 = vunpack.c.h.b16 %v971
          %v1014 = vunpack.c.l.b16 %v972
          %v1015 = vunpack.c.h.b16 %v972
          %v1016 = vunpack.c.l.b16 %v973
          %v1017 = vunpack.c.h.b16 %v973
          %v1018 = vunpack.c.l.b16 %v974
          %v1019 = vunpack.c.h.b16 %v974
          %v1020 = vunpack.c.l.b16 %v975
          %v1021 = vunpack.c.h.b16 %v975
          %v1022 = vunpack.c.l.b16 %v976
          %v1023 = vunpack.c.h.b16 %v976
          %v1024 = vunpack.c.l.b16 %v977
          %v1025 = vunpack.c.h.b16 %v977
          %v1026 = vpack.c.b16 %v994, %v994
          %v1027 = vpack.c.b16 %v995, %v995
          %v1028 = vpack.c.b16 %v996, %v996
          %v1029 = vpack.c.b16 %v997, %v997
          %v1030 = vpack.c.b16 %v998, %v998
          %v1031 = vpack.c.b16 %v999, %v999
          %v1032 = vpack.c.b16 %v1000, %v1000
          %v1033 = vpack.c.b16 %v1001, %v1001
          %v1034 = vpack.c.b16 %v1002, %v1002
          %v1035 = vpack.c.b16 %v1003, %v1003
          %v1036 = vpack.c.b16 %v1004, %v1004
          %v1037 = vpack.c.b16 %v1005, %v1005
          %v1038 = vpack.c.b16 %v1006, %v1006
          %v1039 = vpack.c.b16 %v1007, %v1007
          %v1040 = vpack.c.b16 %v1008, %v1008
          %v1041 = vpack.c.b16 %v1009, %v1009
          %v1042 = vpack.c.b16 %v1010, %v1010
          %v1043 = vpack.c.b16 %v1011, %v1011
          %v1044 = vpack.c.b16 %v1012, %v1012
          %v1045 = vpack.c.b16 %v1013, %v1013
          %v1046 = vpack.c.b16 %v1014, %v1014
          %v1047 = vpack.c.b16 %v1015, %v1015
          %v1048 = vpack.c.b16 %v1016, %v1016
          %v1049 = vpack.c.b16 %v1017, %v1017
          %v1050 = vpack.c.b16 %v1018, %v1018
          %v1051 = vpack.c.b16 %v1019, %v1019
          %v1052 = vpack.c.b16 %v1020, %v1020
          %v1053 = vpack.c.b16 %v1021, %v1021
          %v1054 = vpack.c.b16 %v1022, %v1022
          %v1055 = vpack.c.b16 %v1023, %v1023
          %v1056 = vpack.c.b16 %v1024, %v1024
          %v1057 = vpack.c.b16 %v1025, %v1025
          %vm1090 = vcmask 519168
          %1091 = vst.msk [vmem:[%s309] sm:$0xf] %vm1090, %v1026
          %1092 = vst.msk [vmem:[%s309 + $0x4] sm:$0xf] %vm1090, %v1027
          %1093 = vst.msk [vmem:[%s309 + $0x8] sm:$0xf] %vm1090, %v1028
          %1094 = vst.msk [vmem:[%s309 + $0xc] sm:$0xf] %vm1090, %v1029
          %1095 = vst.msk [vmem:[%s309 + $0x10] sm:$0xf] %vm1090, %v1030
          %1096 = vst.msk [vmem:[%s309 + $0x14] sm:$0xf] %vm1090, %v1031
          %1097 = vst.msk [vmem:[%s309 + $0x18] sm:$0xf] %vm1090, %v1032
          %1098 = vst.msk [vmem:[%s309 + $0x1c] sm:$0xf] %vm1090, %v1033
          %1099 = vst.msk [vmem:[%s309 + $0x20] sm:$0xf] %vm1090, %v1034
          %1100 = vst.msk [vmem:[%s309 + $0x24] sm:$0xf] %vm1090, %v1035
          %1101 = vst.msk [vmem:[%s309 + $0x28] sm:$0xf] %vm1090, %v1036
          %1102 = vst.msk [vmem:[%s309 + $0x2c] sm:$0xf] %vm1090, %v1037
          %1103 = vst.msk [vmem:[%s309 + $0x30] sm:$0xf] %vm1090, %v1038
          %1104 = vst.msk [vmem:[%s309 + $0x34] sm:$0xf] %vm1090, %v1039
          %1105 = vst.msk [vmem:[%s309 + $0x38] sm:$0xf] %vm1090, %v1040
          %1106 = vst.msk [vmem:[%s309 + $0x3c] sm:$0xf] %vm1090, %v1041
          %1107 = vst.msk [vmem:[%s309 + $0x40] sm:$0xf] %vm1090, %v1042
          %1108 = vst.msk [vmem:[%s309 + $0x44] sm:$0xf] %vm1090, %v1043
          %1109 = vst.msk [vmem:[%s309 + $0x48] sm:$0xf] %vm1090, %v1044
          %1110 = vst.msk [vmem:[%s309 + $0x4c] sm:$0xf] %vm1090, %v1045
          %1111 = vst.msk [vmem:[%s309 + $0x50] sm:$0xf] %vm1090, %v1046
          %1112 = vst.msk [vmem:[%s309 + $0x54] sm:$0xf] %vm1090, %v1047
          %1113 = vst.msk [vmem:[%s309 + $0x58] sm:$0xf] %vm1090, %v1048
          %1114 = vst.msk [vmem:[%s309 + $0x5c] sm:$0xf] %vm1090, %v1049
          %1115 = vst.msk [vmem:[%s309 + $0x60] sm:$0xf] %vm1090, %v1050
          %1116 = vst.msk [vmem:[%s309 + $0x64] sm:$0xf] %vm1090, %v1051
          %1117 = vst.msk [vmem:[%s309 + $0x68] sm:$0xf] %vm1090, %v1052
          %1118 = vst.msk [vmem:[%s309 + $0x6c] sm:$0xf] %vm1090, %v1053
          %1119 = vst.msk [vmem:[%s309 + $0x70] sm:$0xf] %vm1090, %v1054
          %1120 = vst.msk [vmem:[%s309 + $0x74] sm:$0xf] %vm1090, %v1055
          %1121 = vst.msk [vmem:[%s309 + $0x78] sm:$0xf] %vm1090, %v1056
          %1122 = vst.msk [vmem:[%s309 + $0x7c] sm:$0xf] %vm1090, %v1057
          %v1123 = vsel %vm894, %v930, 0.0
          %v1124 = vsel %vm894, %v931, 0.0
          %v1125 = vadd.f32 %v1123, %v1124
          %v1126 = vsel %vm894, %v932, 0.0
          %v1127 = vadd.f32 %v1125, %v1126
          %v1128 = vsel %vm894, %v933, 0.0
          %v1129 = vadd.f32 %v1127, %v1128
          %v1130 = vsel %vm894, %v934, 0.0
          %v1131 = vadd.f32 %v1129, %v1130
          %v1132 = vsel %vm894, %v935, 0.0
          %v1133 = vadd.f32 %v1131, %v1132
          %v1134 = vsel %vm894, %v936, 0.0
          %v1135 = vadd.f32 %v1133, %v1134
          %v1136 = vsel %vm894, %v937, 0.0
          %v1137 = vadd.f32 %v1135, %v1136
          %v1138 = vsel %vm894, %v938, 0.0
          %v1139 = vadd.f32 %v1137, %v1138
          %v1140 = vsel %vm894, %v939, 0.0
          %v1141 = vadd.f32 %v1139, %v1140
          %v1142 = vsel %vm894, %v940, 0.0
          %v1143 = vadd.f32 %v1141, %v1142
          %v1144 = vsel %vm894, %v941, 0.0
          %v1145 = vadd.f32 %v1143, %v1144
          %v1146 = vsel %vm894, %v942, 0.0
          %v1147 = vadd.f32 %v1145, %v1146
          %v1148 = vsel %vm894, %v943, 0.0
          %v1149 = vadd.f32 %v1147, %v1148
          %v1150 = vsel %vm894, %v944, 0.0
          %v1151 = vadd.f32 %v1149, %v1150
          %v1152 = vsel %vm894, %v945, 0.0
          %v1153 = vadd.f32 %v1151, %v1152
          %v1154 = vsel %vm894, %v946, 0.0
          %v1155 = vadd.f32 %v1153, %v1154
          %v1156 = vsel %vm894, %v947, 0.0
          %v1157 = vadd.f32 %v1155, %v1156
          %v1158 = vsel %vm894, %v948, 0.0
          %v1159 = vadd.f32 %v1157, %v1158
          %v1160 = vsel %vm894, %v949, 0.0
          %v1161 = vadd.f32 %v1159, %v1160
          %v1162 = vsel %vm894, %v950, 0.0
          %v1163 = vadd.f32 %v1161, %v1162
          %v1164 = vsel %vm894, %v951, 0.0
          %v1165 = vadd.f32 %v1163, %v1164
          %v1166 = vsel %vm894, %v952, 0.0
          %v1167 = vadd.f32 %v1165, %v1166
          %v1168 = vsel %vm894, %v953, 0.0
          %v1169 = vadd.f32 %v1167, %v1168
          %v1170 = vsel %vm894, %v954, 0.0
          %v1171 = vadd.f32 %v1169, %v1170
          %v1172 = vsel %vm894, %v955, 0.0
          %v1173 = vadd.f32 %v1171, %v1172
          %v1174 = vsel %vm894, %v956, 0.0
          %v1175 = vadd.f32 %v1173, %v1174
          %v1176 = vsel %vm894, %v957, 0.0
          %v1177 = vadd.f32 %v1175, %v1176
          %v1178 = vsel %vm894, %v958, 0.0
          %v1179 = vadd.f32 %v1177, %v1178
          %v1180 = vsel %vm894, %v959, 0.0
          %v1181 = vadd.f32 %v1179, %v1180
          %v1182 = vsel %vm894, %v960, 0.0
          %v1183 = vadd.f32 %v1181, %v1182
          %v1184 = vsel %vm894, %v961, 0.0
          %v1185 = vadd.f32 %v1183, %v1184
          %1186 = vst.msk [vmem:[%s283] sm:$0xff] %vm894, %v1185
          %v1187 = vmul.f32 %v930, %v930
          %v1188 = vmul.f32 %v931, %v931
          %v1189 = vmul.f32 %v932, %v932
          %v1190 = vmul.f32 %v933, %v933
          %v1191 = vmul.f32 %v934, %v934
          %v1192 = vmul.f32 %v935, %v935
          %v1193 = vmul.f32 %v936, %v936
          %v1194 = vmul.f32 %v937, %v937
          %v1195 = vmul.f32 %v938, %v938
          %v1196 = vmul.f32 %v939, %v939
          %v1197 = vmul.f32 %v940, %v940
          %v1198 = vmul.f32 %v941, %v941
          %v1199 = vmul.f32 %v942, %v942
          %v1200 = vmul.f32 %v943, %v943
          %v1201 = vmul.f32 %v944, %v944
          %v1202 = vmul.f32 %v945, %v945
          %v1203 = vmul.f32 %v946, %v946
          %v1204 = vmul.f32 %v947, %v947
          %v1205 = vmul.f32 %v948, %v948
          %v1206 = vmul.f32 %v949, %v949
          %v1207 = vmul.f32 %v950, %v950
          %v1208 = vmul.f32 %v951, %v951
          %v1209 = vmul.f32 %v952, %v952
          %v1210 = vmul.f32 %v953, %v953
          %v1211 = vmul.f32 %v954, %v954
          %v1212 = vmul.f32 %v955, %v955
          %v1213 = vmul.f32 %v956, %v956
          %v1214 = vmul.f32 %v957, %v957
          %v1215 = vmul.f32 %v958, %v958
          %v1216 = vmul.f32 %v959, %v959
          %v1217 = vmul.f32 %v960, %v960
          %v1218 = vmul.f32 %v961, %v961
          %v1219 = vsel %vm894, %v1187, 0.0
          %v1220 = vsel %vm894, %v1188, 0.0
          %v1221 = vadd.f32 %v1219, %v1220
          %v1222 = vsel %vm894, %v1189, 0.0
          %v1223 = vadd.f32 %v1221, %v1222
          %v1224 = vsel %vm894, %v1190, 0.0
          %v1225 = vadd.f32 %v1223, %v1224
          %v1226 = vsel %vm894, %v1191, 0.0
          %v1227 = vadd.f32 %v1225, %v1226
          %v1228 = vsel %vm894, %v1192, 0.0
          %v1229 = vadd.f32 %v1227, %v1228
          %v1230 = vsel %vm894, %v1193, 0.0
          %v1231 = vadd.f32 %v1229, %v1230
          %v1232 = vsel %vm894, %v1194, 0.0
          %v1233 = vadd.f32 %v1231, %v1232
          %v1234 = vsel %vm894, %v1195, 0.0
          %v1235 = vadd.f32 %v1233, %v1234
          %v1236 = vsel %vm894, %v1196, 0.0
          %v1237 = vadd.f32 %v1235, %v1236
          %v1238 = vsel %vm894, %v1197, 0.0
          %v1239 = vadd.f32 %v1237, %v1238
          %v1240 = vsel %vm894, %v1198, 0.0
          %v1241 = vadd.f32 %v1239, %v1240
          %v1242 = vsel %vm894, %v1199, 0.0
          %v1243 = vadd.f32 %v1241, %v1242
          %v1244 = vsel %vm894, %v1200, 0.0
          %v1245 = vadd.f32 %v1243, %v1244
          %v1246 = vsel %vm894, %v1201, 0.0
          %v1247 = vadd.f32 %v1245, %v1246
          %v1248 = vsel %vm894, %v1202, 0.0
          %v1249 = vadd.f32 %v1247, %v1248
          %v1250 = vsel %vm894, %v1203, 0.0
          %v1251 = vadd.f32 %v1249, %v1250
          %v1252 = vsel %vm894, %v1204, 0.0
          %v1253 = vadd.f32 %v1251, %v1252
          %v1254 = vsel %vm894, %v1205, 0.0
          %v1255 = vadd.f32 %v1253, %v1254
          %v1256 = vsel %vm894, %v1206, 0.0
          %v1257 = vadd.f32 %v1255, %v1256
          %v1258 = vsel %vm894, %v1207, 0.0
          %v1259 = vadd.f32 %v1257, %v1258
          %v1260 = vsel %vm894, %v1208, 0.0
          %v1261 = vadd.f32 %v1259, %v1260
          %v1262 = vsel %vm894, %v1209, 0.0
          %v1263 = vadd.f32 %v1261, %v1262
          %v1264 = vsel %vm894, %v1210, 0.0
          %v1265 = vadd.f32 %v1263, %v1264
          %v1266 = vsel %vm894, %v1211, 0.0
          %v1267 = vadd.f32 %v1265, %v1266
          %v1268 = vsel %vm894, %v1212, 0.0
          %v1269 = vadd.f32 %v1267, %v1268
          %v1270 = vsel %vm894, %v1213, 0.0
          %v1271 = vadd.f32 %v1269, %v1270
          %v1272 = vsel %vm894, %v1214, 0.0
          %v1273 = vadd.f32 %v1271, %v1272
          %v1274 = vsel %vm894, %v1215, 0.0
          %v1275 = vadd.f32 %v1273, %v1274
          %v1276 = vsel %vm894, %v1216, 0.0
          %v1277 = vadd.f32 %v1275, %v1276
          %v1278 = vsel %vm894, %v1217, 0.0
          %v1279 = vadd.f32 %v1277, %v1278
          %v1280 = vsel %vm894, %v1218, 0.0
          %v1281 = vadd.f32 %v1279, %v1280
          %1282 = vst.msk [vmem:[%s290] sm:$0xff] %vm894, %v1281
        $region40: #{tpu_custom_call.1} parent=27 // pred_fallthru
          _
        %s1283 = smul.u32 32, %s30
        %p1284 = scmp.lt.s32.totalorder %s1283, 63
        %s1285 = scalar_select %p1284, %s1283, 63
        %p1286 = scmp.lt.s32.totalorder %s31, 0
        %s1287 = scalar_select %p1286, %s31, 0
        %s1288 = sadd.s32 %s1287, %s1285
        %s1289 = smul.addr %s1288, 4
        %s1290 = scalar_lea.vmem %s2, %s1289
        %s1291 = sand.u32 %s138, 1
        %s1292 = scalar_lea.sflag [#allocation5], %s1291
        %s1293 = sand.u32 %s138, 1
        %s1294 = smul.addr %s1293, 8
        %s1295 = scalar_lea.vmem [#allocation6], %s1294
        %s1296 = sand.u32 %s166, 1
        %s1297 = scalar_lea.sflag [#allocation8], %s1296
        %s1298 = sand.u32 %s166, 1
        %s1299 = smul.addr %s1298, 8
        %s1300 = scalar_lea.vmem [#allocation7], %s1299
        // Predicated region
        $region41: #{tpu_custom_call.1} parent=27 // pred_check
          %p1301 = pneg %p120
        $region42: #{tpu_custom_call.1} parent=27 // pred_check_branch
          %1303 = sbr.rel (%p1301) target = $region44
        $region43: #{tpu_custom_call.1} parent=27 // pred_region
          %s1304 = smul.u32 32, %s30
        $region44: #{tpu_custom_call.1} parent=27 // pred_fallthru
          _
        // Predicated region
        $region45: #{tpu_custom_call.1} parent=27 // pred_check
          %p1305 = pneg %p148
        $region46: #{tpu_custom_call.1} parent=27 // pred_check_branch
          %1307 = sbr.rel (%p1305) target = $region48
        $region47: #{tpu_custom_call.1} parent=27 // pred_region
          %s1309 = ssub.s32 128, 128
          %1310 = vsyncadd %s1292, %s1309
          %s1311 = sadd.s32 %s31, %s30
          %s1312 = smul.addr %s1311, 128
          %s1313 = scalar_lea.hbm %s3, %s1312
          %s1315 = sshll.u32 %s1295, 4
          %s1316 = int_to_ptr.vmem [resolvable:$true] %s1315
          %1318 = dma.vmem_to_hbm [thread:$0]  %s1316, 128, %s1313, %s1292
        $region48: #{tpu_custom_call.1} parent=27 // pred_fallthru
          _
        // Predicated region
        $region49: #{tpu_custom_call.1} parent=27 // pred_check
          %p1319 = pneg %p176
        $region50: #{tpu_custom_call.1} parent=27 // pred_check_branch
          %1321 = sbr.rel (%p1319) target = $region52
        $region51: #{tpu_custom_call.1} parent=27 // pred_region
          %s1323 = ssub.s32 128, 128
          %1324 = vsyncadd %s1297, %s1323
          %s1325 = sadd.s32 %s31, %s30
          %s1326 = smul.addr %s1325, 128
          %s1327 = scalar_lea.hbm %s4, %s1326
          %s1329 = sshll.u32 %s1300, 4
          %s1330 = int_to_ptr.vmem [resolvable:$true] %s1329
          %1332 = dma.vmem_to_hbm [thread:$0]  %s1330, 128, %s1327, %s1297
        $region52: #{tpu_custom_call.1} parent=27 // pred_fallthru
          _
      $region28: #{tpu_custom_call.1} parent=5 // pred_fallthru
        _
      %p1333 = scmp.le.s32.totalorder 2, %s20
      // Predicated region
      $region53: #{tpu_custom_call.1} parent=5 // pred_check
        %p1334 = pneg %p1333
      $region54: #{tpu_custom_call.1} parent=5 // pred_check_branch
        %1336 = sbr.rel (%p1334) target = $region56
      $region55: #{tpu_custom_call.1} parent=5 // pred_region
        %s1337 = ssub.s32 %s20, 2
        // Predicated region
        $region57: #{tpu_custom_call.1} parent=55 // pred_check
          %p1338 = pneg %p126
        $region58: #{tpu_custom_call.1} parent=55 // pred_check_branch
          %1340 = sbr.rel (%p1338) target = $region60
        $region59: #{tpu_custom_call.1} parent=55 // pred_region
          %s1341 = smul.u32 32, %s33
          %p1342 = scmp.lt.s32.totalorder %s1341, 63
          %s1343 = scalar_select %p1342, %s1341, 63
          %p1344 = scmp.lt.s32.totalorder %s34, 0
          %s1345 = scalar_select %p1344, %s34, 0
          %s1346 = sadd.s32 %s1345, %s1343
          %s1347 = smul.addr %s1346, 4
          %s1348 = scalar_lea.vmem %s2, %s1347
        $region60: #{tpu_custom_call.1} parent=55 // pred_fallthru
          _
        // Predicated region
        $region61: #{tpu_custom_call.1} parent=55 // pred_check
          %p1349 = pneg %p154
        $region62: #{tpu_custom_call.1} parent=55 // pred_check_branch
          %1351 = sbr.rel (%p1349) target = $region64
        $region63: #{tpu_custom_call.1} parent=55 // pred_region
          %s1352 = sand.u32 %s139, 1
          %s1353 = scalar_lea.sflag [#allocation5], %s1352
          %s1354 = sand.u32 %s139, 1
          %s1355 = smul.addr %s1354, 8
          %s1356 = scalar_lea.vmem [#allocation6], %s1355
          %1357 = dma.done %s1353, 128
        $region64: #{tpu_custom_call.1} parent=55 // pred_fallthru
          _
        // Predicated region
        $region65: #{tpu_custom_call.1} parent=55 // pred_check
          %p1358 = pneg %p182
        $region66: #{tpu_custom_call.1} parent=55 // pred_check_branch
          %1360 = sbr.rel (%p1358) target = $region68
        $region67: #{tpu_custom_call.1} parent=55 // pred_region
          %s1361 = sand.u32 %s167, 1
          %s1362 = scalar_lea.sflag [#allocation8], %s1361
          %s1363 = sand.u32 %s167, 1
          %s1364 = smul.addr %s1363, 8
          %s1365 = scalar_lea.vmem [#allocation7], %s1364
          %1366 = dma.done %s1362, 128
        $region68: #{tpu_custom_call.1} parent=55 // pred_fallthru
          _
      $region56: #{tpu_custom_call.1} parent=5 // pred_fallthru
        _
    $region6: #{tpu_custom_call.1} parent=1 // loop_footer
      %s24 = sadd.s32 1, %s20
    $region7: #{tpu_custom_call.1} parent=1 // loop_footer_branch
      %19 = sbr.rel target = $region3
    $region8: #{tpu_custom_call.1} parent=1 // loop_exit
      _
    %1367 = vsyncpa [#allocation4], 1
    %s1368 = scalar_lea.sflag [#allocation4], 1
    %1369 = vsyncpa %s1368, 1
    %1370 = vsyncpa [#allocation5], 1
    %s1371 = scalar_lea.sflag [#allocation5], 1
    %1372 = vsyncpa %s1371, 1
    %1373 = vsyncpa [#allocation8], 1
    %s1374 = scalar_lea.sflag [#allocation8], 1
    %1375 = vsyncpa %s1374, 1

</llo_original>
